<compile_context>
chip_gen: v7x
topology: tpu7x:2x2x1
jax: 0.10.0
libtpu: 0.0.40
codegen_flags: <defaults>
</compile_context>

<pallas_src>
import functools
import math

import jax
import jax.numpy as jnp
from jax.experimental import pallas as pl
from jax.experimental.pallas import tpu as pltpu

F32 = jnp.float32
LEAKY_SLOPE = 0.01      # nn.LeakyReLU default
GN_EPS = 1e-5           # GraphNorm eps (PyG default)


def _round_up(x, m):
    return ((x + m - 1) // m) * m


def _leaky_relu(x):
    return jnp.where(x >= 0, x, LEAKY_SLOPE * x)


def _silu(x):
    return x * jax.nn.sigmoid(x)


# ----------------------------------------------------------------------------
# Kernel 1: per-edge hot path, gridded over edge tiles.
#   input : packed slab [tE, IN_W] = [x_row | x_col | edge_s | geom4 | d_m | d | 1 | pad]
#   output: lane-dense slab [tE, OUT_W] = [ l1 | edge_s_new | v_col | pad ]
# ----------------------------------------------------------------------------
def _edge_kernel(inv_sqrt_dh, dim_tmp, num_head,
                 slab_ref, w1_ref, wg2m_ref, wm2_ref, bm2_ref,
                 wp1m_ref, wp2_ref, bp2_ref, we_ref, be_ref, rexp_ref,
                 out_ref):
    Dt = dim_tmp
    slab = slab_ref[...]                                              # [tE, IN_W]

    # one fused block-structured matmul:  q | k | v | geom-h1 | m1-partial | posgate-partial
    s1 = jnp.dot(slab, w1_ref[...], preferred_element_type=F32)      # [tE, 6*Dt]
    q = s1[:, 0 * Dt:1 * Dt]                                          # x_row@Wq + bq
    k = s1[:, 1 * Dt:2 * Dt]                                          # x_col@Wk + bk
    v = s1[:, 2 * Dt:3 * Dt]                                          # x_col@Wv + bv
    hg = _silu(s1[:, 3 * Dt:4 * Dt])                                  # SiLU(geom@Wg1 + bg1)
    me = s1[:, 4 * Dt:5 * Dt]                  # edge_s@Wm1e + d_m*wm1d + bm1 + 0.1*bg2@Wm1e
    pp = s1[:, 5 * Dt:6 * Dt]                                         # d_raw*wp1d + bp1

    # m_layer (geometry-embedding add folded into wg2m = 0.1 * Wg2 @ Wm1e)
    hm = _leaky_relu(me + jnp.dot(hg, wg2m_ref[...], preferred_element_type=F32))
    m_ij = jnp.dot(hm, wm2_ref[...], preferred_element_type=F32) + bm2_ref[...]

    # attention logits
    a_flat = q * (k * m_ij) * inv_sqrt_dh                             # [tE, Dt]

    # pos_attention_gate
    hp = _silu(jnp.dot(m_ij, wp1m_ref[...], preferred_element_type=F32) + pp)
    pos_gate = jax.nn.sigmoid(
        jnp.dot(hp, wp2_ref[...], preferred_element_type=F32) + bp2_ref[...])   # [tE, H]

    rexp = rexp_ref[...]                                              # [H, Dt] head blocks
    # per-head L1 decoupled from the gate (sigmoid gate > 0 and constant within a head)
    l1 = pos_gate * jax.lax.dot_general(
        jnp.abs(a_flat), rexp,
        dimension_numbers=(((1,), (1,)), ((), ())),
        preferred_element_type=F32)                                   # [tE, H]

    gate_expand = jnp.dot(pos_gate, rexp, preferred_element_type=F32)  # per-head -> per-feat
    a_out = a_flat * gate_expand
    e_new = jnp.dot(a_out, we_ref[...], preferred_element_type=F32) + be_ref[...]

    pad = out_ref.shape[1] - (num_head + e_new.shape[1] + Dt)
    pieces = [l1, e_new, v]
    if pad > 0:
        pieces.append(jnp.zeros((slab.shape[0], pad), F32))
    out_ref[...] = jnp.concatenate(pieces, axis=-1)                   # single lane-dense store


# ----------------------------------------------------------------------------
# Kernel 2a: per-node  m2f + gate + residual   (gridded over node tiles)
#   output slab [tN, NA_W] = [ x1 | g | pad ]
# ----------------------------------------------------------------------------
def _node_kernel_a(dim_tmp, agg_ref, ns_ref, wagg_ref, wns_ref, bns_ref, bg_ref, out_ref):
    Dt = dim_tmp
    agg = agg_ref[...]
    ns = ns_ref[...]
    # wagg = [Wm2f | Wm2f @ (Wga + Wgc)] ; gate decomposed (no concat copy)
    a1 = jnp.dot(agg, wagg_ref[...], preferred_element_type=F32)      # [tN, 2*Dt]
    ns_new = a1[:, 0:Dt] + bns_ref[...]
    g = jax.nn.sigmoid(a1[:, Dt:2 * Dt]
                       + jnp.dot(ns, wns_ref[...], preferred_element_type=F32)
                       + bg_ref[...])
    x1 = g * ns_new + ns
    pad = out_ref.shape[1] - 2 * Dt
    pieces = [x1, g]
    if pad > 0:
        pieces.append(jnp.zeros((agg.shape[0], pad), F32))
    out_ref[...] = jnp.concatenate(pieces, axis=-1)


# ----------------------------------------------------------------------------
# Kernel 2b: per-node fin-MLP + residual (gridded over node tiles)
# ----------------------------------------------------------------------------
def _node_kernel_b(norm1_ref, g_ref, wf1_ref, bf1_ref, wf2_ref, bf2_ref, out_ref):
    n1 = norm1_ref[...]
    g = g_ref[...]
    fh = _leaky_relu(jnp.dot(n1, wf1_ref[...], preferred_element_type=F32) + bf1_ref[...])
    fin = jnp.dot(fh, wf2_ref[...], preferred_element_type=F32) + bf2_ref[...]
    x2 = g * fin + n1
    pad = out_ref.shape[1] - x2.shape[1]
    if pad > 0:
        x2 = jnp.concatenate([x2, jnp.zeros((x2.shape[0], pad), F32)], axis=-1)
    out_ref[...] = x2


# ----------------------------------------------------------------------------
# XLA glue helpers (irregular / O(E), O(N) segment ops)
# ----------------------------------------------------------------------------
def _edge_geometry(pos, row, col, num_nodes):
    E = row.shape[0]
    edge_vec = pos[col] - pos[row]
    edge_dist = jnp.sqrt(jnp.sum(edge_vec * edge_vec, axis=-1, keepdims=True))
    edge_unit = edge_vec / (edge_dist + 1e-8)
    sum_src = jax.ops.segment_sum(edge_unit, row, num_segments=num_nodes)
    sum_dst = jax.ops.segment_sum(edge_unit, col, num_segments=num_nodes)
    ones_e = jnp.ones((E,), F32)
    deg_src = jax.ops.segment_sum(ones_e, row, num_segments=num_nodes)
    deg_dst = jax.ops.segment_sum(ones_e, col, num_segments=num_nodes)
    neigh_src = sum_src[row] - edge_unit
    neigh_dst = sum_dst[col] - edge_unit
    dot_src = jnp.sum(edge_unit * neigh_src, axis=-1, keepdims=True)
    norm_src = jnp.sqrt(jnp.sum(neigh_src * neigh_src, axis=-1, keepdims=True))
    angle_cos = dot_src / (norm_src + 1e-8)
    normal1 = jnp.cross(edge_unit, neigh_src)
    normal2 = jnp.cross(edge_unit, neigh_dst)
    n1 = jnp.linalg.norm(normal1, axis=-1, keepdims=True)
    n2 = jnp.linalg.norm(normal2, axis=-1, keepdims=True)
    dihedral_cos = jnp.sum(normal1 * normal2, axis=-1, keepdims=True) / (n1 * n2 + 1e-8)
    is_adj = jnp.logical_or(deg_src[row] > 1.0, deg_dst[col] > 1.0)[:, None].astype(F32)
    return jnp.concatenate([edge_dist / 10.0, angle_cos, dihedral_cos, is_adj], axis=-1)


def _graph_norm(x, batch, inv_cnt, w, b, s, num_graphs):
    mean = jax.ops.segment_sum(x, batch, num_segments=num_graphs) * inv_cnt     # [G, Dt]
    cent = x - mean[batch] * s
    var = jax.ops.segment_sum(cent * cent, batch, num_segments=num_graphs) * inv_cnt
    rstd = jax.lax.rsqrt(var + GN_EPS)
    return w * cent * rstd[batch] + b


def _segment_softmax(logits, seg, num_segments):
    seg_max = jax.ops.segment_max(logits, seg, num_segments=num_segments)
    num = jnp.exp(logits - seg_max[seg])
    denom = jax.ops.segment_sum(num, seg, num_segments=num_segments)
    return num / (denom[seg] + 1e-16)     # torch_geometric.utils.softmax adds 1e-16


# ----------------------------------------------------------------------------
# Full forward
# ----------------------------------------------------------------------------
def egnn_forward(params, node_s, edge_s, edge_index, pos, mask_edge_inv, batch,
                 *, num_head, num_graphs, tile_e=1024, tile_n=512):
    N, dim_in = node_s.shape
    E = edge_index.shape[1]
    dim_tmp = params['wq'].shape[1]
    edge_in = edge_s.shape[1]
    edge_out = params['we'].shape[1]
    Dt = dim_tmp
    assert dim_tmp % num_head == 0
    # reference semantics: edge_s + 0.1*geom_embed (geom_embed width = dim_tmp) and the
    # gate/residual cat([new, old, new-old]) both require these widths to match
    assert edge_in == dim_tmp, "EGNN reference requires edge_in == dim_tmp"
    assert dim_in == dim_tmp, "EGNN reference requires dim_in == dim_tmp"
    dh = dim_tmp // num_head

    row = edge_index[0]
    col = edge_index[1]

    # ----------------- O(E) geometry + distances (XLA glue) -------------------------------
    geom_feats = _edge_geometry(pos, row, col, N)                     # [E, 4]
    diff = pos[row] - pos[col] + 1e-6                                 # torch.pairwise_distance eps
    d_raw = jnp.sqrt(jnp.sum(diff * diff, axis=-1, keepdims=True)) * 0.1
    d_masked = jnp.where(mask_edge_inv, -1.0, d_raw)

    # ----------------- packed per-edge input slab -----------------------------------------
    base = 2 * dim_in + edge_in
    IN_W = _round_up(base + 7, 8)
    scal_pad = IN_W - base - 7
    slab_pieces = [node_s[row], node_s[col], edge_s, geom_feats, d_masked, d_raw,
                   jnp.ones((E, 1), F32)]
    if scal_pad > 0:
        slab_pieces.append(jnp.zeros((E, scal_pad), F32))
    slab = jnp.concatenate(slab_pieces, axis=-1)                      # [E, IN_W]

    # ----------------- fused stage-1 weight matrix + remaining edge weights ---------------
    wm1 = params['wm1']
    wm1e, wm1d = wm1[:edge_in], wm1[edge_in]                          # [Dt, Dt], [Dt]
    wp1 = params['wp1']
    wp1m, wp1d = wp1[:Dt], wp1[Dt]                                    # [Dt, Dt], [Dt]

    w1 = jnp.zeros((IN_W, 6 * Dt), F32)
    w1 = w1.at[0:dim_in, 0:Dt].set(params['wq'])
    w1 = w1.at[dim_in:2 * dim_in, Dt:2 * Dt].set(params['wk'])
    w1 = w1.at[dim_in:2 * dim_in, 2 * Dt:3 * Dt].set(params['wv'])
    w1 = w1.at[2 * dim_in:base, 4 * Dt:5 * Dt].set(wm1e)
    w1 = w1.at[base:base + 4, 3 * Dt:4 * Dt].set(params['wg1'])
    w1 = w1.at[base + 4, 4 * Dt:5 * Dt].set(wm1d)                     # d_masked row
    w1 = w1.at[base + 5, 5 * Dt:6 * Dt].set(wp1d)                     # d_raw row
    ones_row = base + 6
    w1 = w1.at[ones_row, 0:Dt].set(params['bq'][0])
    w1 = w1.at[ones_row, Dt:2 * Dt].set(params['bk'][0])
    w1 = w1.at[ones_row, 2 * Dt:3 * Dt].set(params['bv'][0])
    w1 = w1.at[ones_row, 3 * Dt:4 * Dt].set(params['bg1'][0])
    w1 = w1.at[ones_row, 4 * Dt:5 * Dt].set(
        params['bm1'][0] + 0.1 * (params['bg2'] @ wm1e)[0])
    w1 = w1.at[ones_row, 5 * Dt:6 * Dt].set(params['bp1'][0])

    wg2m = 0.1 * (params['wg2'] @ wm1e)                               # geometry-add fold
    rexp = jnp.repeat(jnp.eye(num_head, dtype=F32), dh, axis=1)       # [H, Dt]

    edge_consts = [w1, wg2m, params['wm2'], params['bm2'],
                   wp1m, params['wp2'], params['bp2'],
                   params['we'], params['be'], rexp]

    # ----------------- edge kernel: grid over edge tiles ----------------------------------
    tE = _round_up(min(tile_e, _round_up(E, 8)), 8)
    E_pad = _round_up(E, tE)
    slab_p = jnp.pad(slab, ((0, E_pad - E), (0, 0))) if E_pad != E else slab

    OUT_W = _round_up(num_head + edge_out + dim_tmp, 128)

    edge_in_specs = ([pl.BlockSpec((tE, IN_W), lambda i: (i, 0))]
                     + [pl.BlockSpec(w.shape, lambda i: (0, 0)) for w in edge_consts])

    flops = 2 * E_pad * (IN_W * 6 * Dt + 3 * Dt * Dt + 3 * Dt * num_head + Dt * edge_out)
    transcendentals = E_pad * (2 * Dt + num_head)
    bytes_accessed = 4 * (E_pad * (IN_W + OUT_W) + sum(int(w.size) for w in edge_consts))

    edge_slab = pl.pallas_call(
        functools.partial(_edge_kernel, float(1.0 / math.sqrt(dh)), dim_tmp, num_head),
        out_shape=jax.ShapeDtypeStruct((E_pad, OUT_W), F32),
        grid=(E_pad // tE,),
        in_specs=edge_in_specs,
        out_specs=pl.BlockSpec((tE, OUT_W), lambda i: (i, 0)),
        compiler_params=pltpu.CompilerParams(
            dimension_semantics=("parallel",),
            vmem_limit_bytes=48 * 1024 * 1024),     # raise toward 64-96 MiB on v6e if needed
        cost_estimate=pl.CostEstimate(flops=int(flops),
                                      transcendentals=int(transcendentals),
                                      bytes_accessed=int(bytes_accessed)),
    )(slab_p, *edge_consts)

    l1 = edge_slab[:E, 0:num_head]                                    # [E, H]
    edge_s_new = edge_slab[:E, num_head:num_head + edge_out]          # [E, edge_out]
    v_col = edge_slab[:E, num_head + edge_out:num_head + edge_out + dim_tmp]   # [E, Dt]

    # ----------------- segment softmax over destination + weighted aggregation ------------
    w_ij = _segment_softmax(l1, row, N)                               # [E, H]
    agg = jax.ops.segment_sum(
        (v_col.reshape(E, num_head, dh) * w_ij[:, :, None]).reshape(E, dim_tmp),
        row, num_segments=N)                                          # [N, Dt]

    # ----------------- node tail -----------------------------------------------------------
    wgate = params['wgate']
    wga, wgb, wgc = wgate[0:Dt], wgate[Dt:2 * Dt], wgate[2 * Dt:3 * Dt]
    wgAC = wga + wgc
    wagg = jnp.concatenate([params['wm2f'], params['wm2f'] @ wgAC], axis=1)   # [Dt, 2Dt]
    wns = wgb - wgc                                                    # [Dt, Dt]
    bgf = params['bgate'] + params['bm2f'] @ wgAC                      # [1, Dt]

    tN = _round_up(min(tile_n, _round_up(N, 8)), 8)
    N_pad = _round_up(N, tN)
    pad_n = lambda x: jnp.pad(x, ((0, N_pad - N), (0, 0))) if N_pad != N else x

    counts = jax.ops.segment_sum(jnp.ones((N,), F32), batch, num_segments=num_graphs)
    inv_cnt = (1.0 / jnp.maximum(counts, 1.0))[:, None]                # [G, 1]

    NA_W = _round_up(2 * Dt, 128)
    na_consts = [wagg, wns, params['bm2f'], bgf]
    slab_a = pl.pallas_call(
        functools.partial(_node_kernel_a, dim_tmp),
        out_shape=jax.ShapeDtypeStruct((N_pad, NA_W), F32),
        grid=(N_pad // tN,),
        in_specs=([pl.BlockSpec((tN, Dt), lambda i: (i, 0))] * 2
                  + [pl.BlockSpec(w.shape, lambda i: (0, 0)) for w in na_consts]),
        out_specs=pl.BlockSpec((tN, NA_W), lambda i: (i, 0)),
        compiler_params=pltpu.CompilerParams(
            dimension_semantics=("parallel",),
            vmem_limit_bytes=32 * 1024 * 1024),
    )(pad_n(agg), pad_n(node_s), *na_consts)
    x1 = slab_a[:N, 0:Dt]
    g = slab_a[:N, Dt:2 * Dt]

    norm1 = _graph_norm(x1, batch, inv_cnt, params['gn1_w'], params['gn1_b'],
                        params['gn1_s'], num_graphs)

    NB_W = _round_up(Dt, 128)
    nb_consts = [params['wf1'], params['bf1'], params['wf2'], params['bf2']]
    slab_b = pl.pallas_call(
        _node_kernel_b,
        out_shape=jax.ShapeDtypeStruct((N_pad, NB_W), F32),
        grid=(N_pad // tN,),
        in_specs=([pl.BlockSpec((tN, Dt), lambda i: (i, 0))] * 2
                  + [pl.BlockSpec(w.shape, lambda i: (0, 0)) for w in nb_consts]),
        out_specs=pl.BlockSpec((tN, NB_W), lambda i: (i, 0)),
        compiler_params=pltpu.CompilerParams(
            dimension_semantics=("parallel",),
            vmem_limit_bytes=32 * 1024 * 1024),
    )(pad_n(norm1), pad_n(g), *nb_consts)
    x2 = slab_b[:N, 0:Dt]

    node_s_new = _graph_norm(x2, batch, inv_cnt, params['gn2_w'], params['gn2_b'],
                             params['gn2_s'], num_graphs)

    delta_x = None  # update_pos=False
    return node_s_new, edge_s_new, delta_x


# ----------------------------------------------------------------------------
# Pure-JAX reference (unfused math, mirrors the PyTorch forward) for validation
# ----------------------------------------------------------------------------
def egnn_reference(params, node_s, edge_s, edge_index, pos, mask_edge_inv, batch,
                   *, num_head, num_graphs):
    N, _ = node_s.shape
    E = edge_index.shape[1]
    dim_tmp = params['wq'].shape[1]
    dh = dim_tmp // num_head
    row, col = edge_index[0], edge_index[1]

    geom_feats = _edge_geometry(pos, row, col, N)
    geom_embed = (_silu(geom_feats @ params['wg1'] + params['bg1']) @ params['wg2']
                  + params['bg2'])
    edge_s2 = edge_s + 0.1 * geom_embed

    q = node_s @ params['wq'] + params['bq']
    k = node_s @ params['wk'] + params['bk']
    v = node_s @ params['wv'] + params['bv']

    diff = pos[row] - pos[col] + 1e-6
    d = jnp.sqrt(jnp.sum(diff * diff, axis=-1, keepdims=True)) * 0.1
    d_m = jnp.where(mask_edge_inv, -1.0, d)

    m_in = jnp.concatenate([edge_s2, d_m], axis=-1)
    m_ij = _leaky_relu(m_in @ params['wm1'] + params['bm1']) @ params['wm2'] + params['bm2']
    k_ij = k[col] * m_ij
    a_ij = (q[row] * k_ij / math.sqrt(dh)).reshape(E, num_head, dh)

    pg_in = jnp.concatenate([m_ij, d], axis=-1)
    pos_gate = jax.nn.sigmoid(_silu(pg_in @ params['wp1'] + params['bp1'])
                              @ params['wp2'] + params['bp2'])
    a_ij = a_ij * pos_gate[:, :, None]

    w_ij = _segment_softmax(jnp.sum(jnp.abs(a_ij), axis=2), row, N)
    agg = jax.ops.segment_sum(
        (w_ij[:, :, None] * v[col].reshape(E, num_head, dh)).reshape(E, dim_tmp),
        row, num_segments=N)
    node_s_new = agg @ params['wm2f'] + params['bm2f']
    edge_s_new = a_ij.reshape(E, dim_tmp) @ params['we'] + params['be']

    g = jax.nn.sigmoid(jnp.concatenate([node_s_new, node_s, node_s_new - node_s], axis=-1)
                       @ params['wgate'] + params['bgate'])

    counts = jax.ops.segment_sum(jnp.ones((N,), F32), batch, num_segments=num_graphs)
    inv_cnt = (1.0 / jnp.maximum(counts, 1.0))[:, None]
    x1 = _graph_norm(g * node_s_new + node_s, batch, inv_cnt,
                     params['gn1_w'], params['gn1_b'], params['gn1_s'], num_graphs)
    fin = _leaky_relu(x1 @ params['wf1'] + params['bf1']) @ params['wf2'] + params['bf2']
    out = _graph_norm(g * fin + x1, batch, inv_cnt,
                      params['gn2_w'], params['gn2_b'], params['gn2_s'], num_graphs)
    return out, edge_s_new


# ----------------------------------------------------------------------------
# Deterministic parameter init (shapes from EGNN.__init__)
# ----------------------------------------------------------------------------
def init_params(key, dim_in, dim_tmp, edge_in, edge_out, num_head):
    keys = iter(jax.random.split(key, 64))

    def lin(in_f, out_f):
        bound = 1.0 / math.sqrt(in_f)
        w = jax.random.uniform(next(keys), (in_f, out_f), F32, -bound, bound)
        b = jax.random.uniform(next(keys), (1, out_f), F32, -bound, bound)
        return w, b

    p = {}
    p['wq'], p['bq'] = lin(dim_in, dim_tmp)
    p['wk'], p['bk'] = lin(dim_in, dim_tmp)
    p['wv'], p['bv'] = lin(dim_in, dim_tmp)
    p['wm1'], p['bm1'] = lin(edge_in + 1, dim_tmp)           # m_layer[0]
    p['wm2'], p['bm2'] = lin(dim_tmp, dim_tmp)               # m_layer[3]
    p['wm2f'], p['bm2f'] = lin(dim_tmp, dim_tmp)             # m2f_layer
    p['we'], p['be'] = lin(dim_tmp, edge_out)                # e_layer
    p['wgate'], p['bgate'] = lin(3 * dim_tmp, dim_tmp)       # gate_layer
    p['wf1'], p['bf1'] = lin(dim_tmp, dim_tmp)               # fin_layer[0]
    p['wf2'], p['bf2'] = lin(dim_tmp, dim_tmp)               # fin_layer[3]
    p['wg1'], p['bg1'] = lin(4, dim_tmp)                     # geom_feat_extractor[0]
    p['wg2'], p['bg2'] = lin(dim_tmp, dim_tmp)               # geom_feat_extractor[2]
    p['wp1'], p['bp1'] = lin(dim_tmp + 1, dim_tmp)           # pos_attention_gate[0]
    p['wp2'], p['bp2'] = lin(dim_tmp, num_head)              # pos_attention_gate[2]
    for name in ('gn1', 'gn2'):                              # GraphNorm canonical init
        p[f'{name}_w'] = jnp.ones((1, dim_tmp), F32)
        p[f'{name}_b'] = jnp.zeros((1, dim_tmp), F32)
        p[f'{name}_s'] = jnp.ones((1, dim_tmp), F32)
    return p


if __name__ == "__main__":
    key = jax.random.PRNGKey(0)

    dim_in = dim_tmp = edge_in = edge_out = 32
    num_head = 8
    N, E, G = 16, 64, 2

    k_param, k_node, k_edge, k_pos, k_row, k_col, k_mask = jax.random.split(key, 7)
    params = init_params(k_param, dim_in, dim_tmp, edge_in, edge_out, num_head)

    node_s = jax.random.normal(k_node, (N, dim_in), F32)
    edge_s = jax.random.normal(k_edge, (E, edge_in), F32)
    pos = jax.random.normal(k_pos, (N, 3), F32)
    row = jax.random.randint(k_row, (E,), 0, N)
    col = jax.random.randint(k_col, (E,), 0, N)
    edge_index = jnp.stack([row, col], axis=0)
    mask_edge_inv = jax.random.bernoulli(k_mask, 0.15, (E, 1))
    batch = (jnp.arange(N) >= N // 2).astype(jnp.int32)      # two graphs of 8 nodes

    fwd = jax.jit(functools.partial(egnn_forward, num_head=num_head, num_graphs=G))
    node_s_new, edge_s_new, delta_x = fwd(params, node_s, edge_s, edge_index, pos,
                                          mask_edge_inv, batch)
    jax.block_until_ready((node_s_new, edge_s_new))

    assert node_s_new.shape == (N, dim_tmp)
    assert edge_s_new.shape == (E, edge_out)
    assert delta_x is None
    assert bool(jnp.all(jnp.isfinite(node_s_new)))
    assert bool(jnp.all(jnp.isfinite(edge_s_new)))

    # numerical check against the unfused pure-JAX reference
    ref_node, ref_edge = egnn_reference(params, node_s, edge_s, edge_index, pos,
                                        mask_edge_inv, batch,
                                        num_head=num_head, num_graphs=G)
    err_n = float(jnp.max(jnp.abs(node_s_new - ref_node)))
    err_e = float(jnp.max(jnp.abs(edge_s_new - ref_edge)))
    assert err_n < 5e-3 and err_e < 5e-3, (err_n, err_e)

    print("KERNEL_OK")
</pallas_src>

<mosaic_0001>
module attributes {stable_mosaic.version = 11 : i64} {
  func.func private @main(%arg0: i32) attributes {dimension_semantics = [#tpu.dimension_semantics<core_parallel>], iteration_bounds = array<i64: 2>, tpu.core_type = #tpu.core_type<sc_scalar_subcore>, window_params = []} {
    return
  }
}

module attributes {stable_mosaic.version = 11 : i64} {
  func.func private @main(%arg0: i32) attributes {dimension_semantics = [#tpu.dimension_semantics<core_parallel>], iteration_bounds = array<i64: 2>, tpu.core_type = #tpu.core_type<sc_scalar_subcore>, window_params = []} {
    return
  }
}

module attributes {stable_mosaic.version = 11 : i64} {
  func.func @_edge_kernel(%arg0: i32, %arg1: memref<64x104xf32, #tpu.memory_space<vmem>>, %arg2: memref<104x192xf32, #tpu.memory_space<vmem>>, %arg3: memref<32x32xf32, #tpu.memory_space<vmem>>, %arg4: memref<32x32xf32, #tpu.memory_space<vmem>>, %arg5: memref<1x32xf32, #tpu.memory_space<vmem>>, %arg6: memref<32x32xf32, #tpu.memory_space<vmem>>, %arg7: memref<32x8xf32, #tpu.memory_space<vmem>>, %arg8: memref<1x8xf32, #tpu.memory_space<vmem>>, %arg9: memref<32x32xf32, #tpu.memory_space<vmem>>, %arg10: memref<1x32xf32, #tpu.memory_space<vmem>>, %arg11: memref<8x32xf32, #tpu.memory_space<vmem>>, %arg12: memref<64x128xf32, #tpu.memory_space<vmem>>) attributes {dimension_semantics = [#tpu.dimension_semantics<parallel>], iteration_bounds = array<i64: 1>, scalar_prefetch = 0 : i64, scratch_operands = 0 : i64, tpu.core_type = #tpu.core_type<tc>, window_params = [{transform_indices = @transform_0, window_bounds = array<i64: 64, 104>}, {pipeline_mode = #tpu.pipeline_mode<synchronous>, transform_indices = @transform_1, window_bounds = array<i64: 104, 192>}, {pipeline_mode = #tpu.pipeline_mode<synchronous>, transform_indices = @transform_2, window_bounds = array<i64: 32, 32>}, {pipeline_mode = #tpu.pipeline_mode<synchronous>, transform_indices = @transform_3, window_bounds = array<i64: 32, 32>}, {pipeline_mode = #tpu.pipeline_mode<synchronous>, transform_indices = @transform_4, window_bounds = array<i64: 1, 32>}, {pipeline_mode = #tpu.pipeline_mode<synchronous>, transform_indices = @transform_5, window_bounds = array<i64: 32, 32>}, {pipeline_mode = #tpu.pipeline_mode<synchronous>, transform_indices = @transform_6, window_bounds = array<i64: 32, 8>}, {pipeline_mode = #tpu.pipeline_mode<synchronous>, transform_indices = @transform_7, window_bounds = array<i64: 1, 8>}, {pipeline_mode = #tpu.pipeline_mode<synchronous>, transform_indices = @transform_8, window_bounds = array<i64: 32, 32>}, {pipeline_mode = #tpu.pipeline_mode<synchronous>, transform_indices = @transform_9, window_bounds = array<i64: 1, 32>}, {pipeline_mode = #tpu.pipeline_mode<synchronous>, transform_indices = @transform_10, window_bounds = array<i64: 8, 32>}, {transform_indices = @transform_11, window_bounds = array<i64: 64, 128>}]} {
    %c0 = arith.constant 0 : index
    %c0_0 = arith.constant 0 : index
    %0 = vector.load %arg1[%c0, %c0_0] : memref<64x104xf32, #tpu.memory_space<vmem>>, vector<64x104xf32>
    %c0_1 = arith.constant 0 : index
    %c0_2 = arith.constant 0 : index
    %1 = vector.load %arg2[%c0_1, %c0_2] : memref<104x192xf32, #tpu.memory_space<vmem>>, vector<104x192xf32>
    %cst = arith.constant dense<0.000000e+00> : vector<64x192xf32>
    %2 = tpu.matmul %0, %1, %cst {dimension_numbers = #tpu.dot_dimension_numbers<[1], [0], [0], [1], [0, 0, 1, 1], [], []>} : vector<64x104xf32>, vector<104x192xf32>, vector<64x192xf32> -> vector<64x192xf32>
    %3 = vector.extract_strided_slice %2 {offsets = [0, 0], sizes = [64, 32], strides = [1, 1]} : vector<64x192xf32> to vector<64x32xf32>
    %4 = vector.extract_strided_slice %2 {offsets = [0, 32], sizes = [64, 32], strides = [1, 1]} : vector<64x192xf32> to vector<64x32xf32>
    %5 = vector.extract_strided_slice %2 {offsets = [0, 64], sizes = [64, 32], strides = [1, 1]} : vector<64x192xf32> to vector<64x32xf32>
    %6 = vector.extract_strided_slice %2 {offsets = [0, 96], sizes = [64, 32], strides = [1, 1]} : vector<64x192xf32> to vector<64x32xf32>
    %7 = arith.negf %6 : vector<64x32xf32>
    %8 = math.exp %7 : vector<64x32xf32>
    %cst_3 = arith.constant 1.000000e+00 : f32
    %9 = vector.broadcast %cst_3 : f32 to vector<64x32xf32>
    %10 = arith.addf %9, %8 : vector<64x32xf32>
    %11 = arith.divf %9, %10 : vector<64x32xf32>
    %12 = arith.mulf %6, %11 : vector<64x32xf32>
    %13 = vector.extract_strided_slice %2 {offsets = [0, 128], sizes = [64, 32], strides = [1, 1]} : vector<64x192xf32> to vector<64x32xf32>
    %14 = vector.extract_strided_slice %2 {offsets = [0, 160], sizes = [64, 32], strides = [1, 1]} : vector<64x192xf32> to vector<64x32xf32>
    %c0_4 = arith.constant 0 : index
    %c0_5 = arith.constant 0 : index
    %15 = vector.load %arg3[%c0_4, %c0_5] : memref<32x32xf32, #tpu.memory_space<vmem>>, vector<32x32xf32>
    %cst_6 = arith.constant dense<0.000000e+00> : vector<64x32xf32>
    %16 = tpu.matmul %12, %15, %cst_6 {dimension_numbers = #tpu.dot_dimension_numbers<[1], [0], [0], [1], [0, 0, 1, 1], [], []>} : vector<64x32xf32>, vector<32x32xf32>, vector<64x32xf32> -> vector<64x32xf32>
    %17 = arith.addf %13, %16 : vector<64x32xf32>
    %cst_7 = arith.constant 0.000000e+00 : f32
    %18 = vector.broadcast %cst_7 : f32 to vector<64x32xf32>
    %19 = arith.cmpf oge, %17, %18 : vector<64x32xf32>
    %cst_8 = arith.constant 0.00999999977 : f32
    %20 = vector.broadcast %cst_8 : f32 to vector<64x32xf32>
    %21 = arith.mulf %20, %17 : vector<64x32xf32>
    %22 = arith.select %19, %17, %21 : vector<64x32xi1>, vector<64x32xf32>
    %c0_9 = arith.constant 0 : index
    %c0_10 = arith.constant 0 : index
    %23 = vector.load %arg4[%c0_9, %c0_10] : memref<32x32xf32, #tpu.memory_space<vmem>>, vector<32x32xf32>
    %cst_11 = arith.constant dense<0.000000e+00> : vector<64x32xf32>
    %24 = tpu.matmul %22, %23, %cst_11 {dimension_numbers = #tpu.dot_dimension_numbers<[1], [0], [0], [1], [0, 0, 1, 1], [], []>} : vector<64x32xf32>, vector<32x32xf32>, vector<64x32xf32> -> vector<64x32xf32>
    %c0_12 = arith.constant 0 : index
    %c0_13 = arith.constant 0 : index
    %25 = vector.load %arg5[%c0_12, %c0_13] : memref<1x32xf32, #tpu.memory_space<vmem>>, vector<1x32xf32>
    %26 = vector.broadcast %25 : vector<1x32xf32> to vector<64x32xf32>
    %27 = arith.addf %24, %26 : vector<64x32xf32>
    %28 = arith.mulf %4, %27 : vector<64x32xf32>
    %29 = arith.mulf %3, %28 : vector<64x32xf32>
    %cst_14 = arith.constant 5.000000e-01 : f32
    %30 = vector.broadcast %cst_14 : f32 to vector<64x32xf32>
    %31 = arith.mulf %29, %30 : vector<64x32xf32>
    %c0_15 = arith.constant 0 : index
    %c0_16 = arith.constant 0 : index
    %32 = vector.load %arg6[%c0_15, %c0_16] : memref<32x32xf32, #tpu.memory_space<vmem>>, vector<32x32xf32>
    %cst_17 = arith.constant dense<0.000000e+00> : vector<64x32xf32>
    %33 = tpu.matmul %27, %32, %cst_17 {dimension_numbers = #tpu.dot_dimension_numbers<[1], [0], [0], [1], [0, 0, 1, 1], [], []>} : vector<64x32xf32>, vector<32x32xf32>, vector<64x32xf32> -> vector<64x32xf32>
    %34 = arith.addf %33, %14 : vector<64x32xf32>
    %35 = arith.negf %34 : vector<64x32xf32>
    %36 = math.exp %35 : vector<64x32xf32>
    %cst_18 = arith.constant 1.000000e+00 : f32
    %37 = vector.broadcast %cst_18 : f32 to vector<64x32xf32>
    %38 = arith.addf %37, %36 : vector<64x32xf32>
    %39 = arith.divf %37, %38 : vector<64x32xf32>
    %40 = arith.mulf %34, %39 : vector<64x32xf32>
    %c0_19 = arith.constant 0 : index
    %c0_20 = arith.constant 0 : index
    %41 = vector.load %arg7[%c0_19, %c0_20] : memref<32x8xf32, #tpu.memory_space<vmem>>, vector<32x8xf32>
    %cst_21 = arith.constant dense<0.000000e+00> : vector<64x8xf32>
    %42 = tpu.matmul %40, %41, %cst_21 {dimension_numbers = #tpu.dot_dimension_numbers<[1], [0], [0], [1], [0, 0, 1, 1], [], []>} : vector<64x32xf32>, vector<32x8xf32>, vector<64x8xf32> -> vector<64x8xf32>
    %c0_22 = arith.constant 0 : index
    %c0_23 = arith.constant 0 : index
    %43 = vector.load %arg8[%c0_22, %c0_23] : memref<1x8xf32, #tpu.memory_space<vmem>>, vector<1x8xf32>
    %44 = vector.broadcast %43 : vector<1x8xf32> to vector<64x8xf32>
    %45 = arith.addf %42, %44 : vector<64x8xf32>
    %46 = arith.negf %45 : vector<64x8xf32>
    %47 = math.exp %46 : vector<64x8xf32>
    %cst_24 = arith.constant 1.000000e+00 : f32
    %48 = vector.broadcast %cst_24 : f32 to vector<64x8xf32>
    %49 = arith.addf %48, %47 : vector<64x8xf32>
    %50 = arith.divf %48, %49 : vector<64x8xf32>
    %c0_25 = arith.constant 0 : index
    %c0_26 = arith.constant 0 : index
    %51 = vector.load %arg11[%c0_25, %c0_26] : memref<8x32xf32, #tpu.memory_space<vmem>>, vector<8x32xf32>
    %52 = math.absf %31 : vector<64x32xf32>
    %cst_27 = arith.constant dense<0.000000e+00> : vector<64x8xf32>
    %53 = tpu.matmul %52, %51, %cst_27 {dimension_numbers = #tpu.dot_dimension_numbers<[1], [1], [0], [0], [0, 0, 1, 0], [], []>} : vector<64x32xf32>, vector<8x32xf32>, vector<64x8xf32> -> vector<64x8xf32>
    %54 = arith.mulf %50, %53 : vector<64x8xf32>
    %cst_28 = arith.constant dense<0.000000e+00> : vector<64x32xf32>
    %55 = tpu.matmul %50, %51, %cst_28 {dimension_numbers = #tpu.dot_dimension_numbers<[1], [0], [0], [1], [0, 0, 1, 1], [], []>} : vector<64x8xf32>, vector<8x32xf32>, vector<64x32xf32> -> vector<64x32xf32>
    %56 = arith.mulf %31, %55 : vector<64x32xf32>
    %c0_29 = arith.constant 0 : index
    %c0_30 = arith.constant 0 : index
    %57 = vector.load %arg9[%c0_29, %c0_30] : memref<32x32xf32, #tpu.memory_space<vmem>>, vector<32x32xf32>
    %cst_31 = arith.constant dense<0.000000e+00> : vector<64x32xf32>
    %58 = tpu.matmul %56, %57, %cst_31 {dimension_numbers = #tpu.dot_dimension_numbers<[1], [0], [0], [1], [0, 0, 1, 1], [], []>} : vector<64x32xf32>, vector<32x32xf32>, vector<64x32xf32> -> vector<64x32xf32>
    %c0_32 = arith.constant 0 : index
    %c0_33 = arith.constant 0 : index
    %59 = vector.load %arg10[%c0_32, %c0_33] : memref<1x32xf32, #tpu.memory_space<vmem>>, vector<1x32xf32>
    %60 = vector.broadcast %59 : vector<1x32xf32> to vector<64x32xf32>
    %61 = arith.addf %58, %60 : vector<64x32xf32>
    %cst_34 = arith.constant 0.000000e+00 : f32
    %62 = vector.broadcast %cst_34 : f32 to vector<64x56xf32>
    %63 = tpu.concatenate %54, %61, %5, %62 in 1 : vector<64x8xf32>, vector<64x32xf32>, vector<64x32xf32>, vector<64x56xf32> -> vector<64x128xf32>
    %c0_35 = arith.constant 0 : index
    %c0_36 = arith.constant 0 : index
    %64 = vector.load %arg12[%c0_35, %c0_36] : memref<64x128xf32, #tpu.memory_space<vmem>>, vector<64x128xf32>
    tpu.vector_store %arg12[%c0_35, %c0_36], %63 {strides = array<i32>} : memref<64x128xf32, #tpu.memory_space<vmem>>, vector<64x128xf32>,
    return
  }
  func.func @transform_0(%arg0: i32) -> (i32, i32) {
    %c0_i32 = arith.constant 0 : i32
    %c0_i32_0 = arith.constant 0 : i32
    return %arg0, %c0_i32 : i32, i32
  }
  func.func @transform_1(%arg0: i32) -> (i32, i32) {
    %c0_i32 = arith.constant 0 : i32
    %c0_i32_0 = arith.constant 0 : i32
    %c0_i32_1 = arith.constant 0 : i32
    return %c0_i32, %c0_i32_0 : i32, i32
  }
  func.func @transform_2(%arg0: i32) -> (i32, i32) {
    %c0_i32 = arith.constant 0 : i32
    %c0_i32_0 = arith.constant 0 : i32
    %c0_i32_1 = arith.constant 0 : i32
    return %c0_i32, %c0_i32_0 : i32, i32
  }
  func.func @transform_3(%arg0: i32) -> (i32, i32) {
    %c0_i32 = arith.constant 0 : i32
    %c0_i32_0 = arith.constant 0 : i32
    %c0_i32_1 = arith.constant 0 : i32
    return %c0_i32, %c0_i32_0 : i32, i32
  }
  func.func @transform_4(%arg0: i32) -> (i32, i32) {
    %c0_i32 = arith.constant 0 : i32
    %c0_i32_0 = arith.constant 0 : i32
    %c0_i32_1 = arith.constant 0 : i32
    return %c0_i32, %c0_i32_0 : i32, i32
  }
  func.func @transform_5(%arg0: i32) -> (i32, i32) {
    %c0_i32 = arith.constant 0 : i32
    %c0_i32_0 = arith.constant 0 : i32
    %c0_i32_1 = arith.constant 0 : i32
    return %c0_i32, %c0_i32_0 : i32, i32
  }
  func.func @transform_6(%arg0: i32) -> (i32, i32) {
    %c0_i32 = arith.constant 0 : i32
    %c0_i32_0 = arith.constant 0 : i32
    %c0_i32_1 = arith.constant 0 : i32
    return %c0_i32, %c0_i32_0 : i32, i32
  }
  func.func @transform_7(%arg0: i32) -> (i32, i32) {
    %c0_i32 = arith.constant 0 : i32
    %c0_i32_0 = arith.constant 0 : i32
    %c0_i32_1 = arith.constant 0 : i32
    return %c0_i32, %c0_i32_0 : i32, i32
  }
  func.func @transform_8(%arg0: i32) -> (i32, i32) {
    %c0_i32 = arith.constant 0 : i32
    %c0_i32_0 = arith.constant 0 : i32
    %c0_i32_1 = arith.constant 0 : i32
    return %c0_i32, %c0_i32_0 : i32, i32
  }
  func.func @transform_9(%arg0: i32) -> (i32, i32) {
    %c0_i32 = arith.constant 0 : i32
    %c0_i32_0 = arith.constant 0 : i32
    %c0_i32_1 = arith.constant 0 : i32
    return %c0_i32, %c0_i32_0 : i32, i32
  }
  func.func @transform_10(%arg0: i32) -> (i32, i32) {
    %c0_i32 = arith.constant 0 : i32
    %c0_i32_0 = arith.constant 0 : i32
    %c0_i32_1 = arith.constant 0 : i32
    return %c0_i32, %c0_i32_0 : i32, i32
  }
  func.func @transform_11(%arg0: i32) -> (i32, i32) {
    %c0_i32 = arith.constant 0 : i32
    %c0_i32_0 = arith.constant 0 : i32
    return %arg0, %c0_i32 : i32, i32
  }
}

module attributes {stable_mosaic.version = 11 : i64} {
  func.func @_node_kernel_a(%arg0: i32, %arg1: memref<16x32xf32, #tpu.memory_space<vmem>>, %arg2: memref<16x32xf32, #tpu.memory_space<vmem>>, %arg3: memref<32x64xf32, #tpu.memory_space<vmem>>, %arg4: memref<32x32xf32, #tpu.memory_space<vmem>>, %arg5: memref<1x32xf32, #tpu.memory_space<vmem>>, %arg6: memref<1x32xf32, #tpu.memory_space<vmem>>, %arg7: memref<16x128xf32, #tpu.memory_space<vmem>>) attributes {dimension_semantics = [#tpu.dimension_semantics<parallel>], iteration_bounds = array<i64: 1>, scalar_prefetch = 0 : i64, scratch_operands = 0 : i64, tpu.core_type = #tpu.core_type<tc>, window_params = [{transform_indices = @transform_0, window_bounds = array<i64: 16, 32>}, {transform_indices = @transform_1, window_bounds = array<i64: 16, 32>}, {pipeline_mode = #tpu.pipeline_mode<synchronous>, transform_indices = @transform_2, window_bounds = array<i64: 32, 64>}, {pipeline_mode = #tpu.pipeline_mode<synchronous>, transform_indices = @transform_3, window_bounds = array<i64: 32, 32>}, {pipeline_mode = #tpu.pipeline_mode<synchronous>, transform_indices = @transform_4, window_bounds = array<i64: 1, 32>}, {pipeline_mode = #tpu.pipeline_mode<synchronous>, transform_indices = @transform_5, window_bounds = array<i64: 1, 32>}, {transform_indices = @transform_6, window_bounds = array<i64: 16, 128>}]} {
    %c0 = arith.constant 0 : index
    %c0_0 = arith.constant 0 : index
    %0 = vector.load %arg1[%c0, %c0_0] : memref<16x32xf32, #tpu.memory_space<vmem>>, vector<16x32xf32>
    %c0_1 = arith.constant 0 : index
    %c0_2 = arith.constant 0 : index
    %1 = vector.load %arg2[%c0_1, %c0_2] : memref<16x32xf32, #tpu.memory_space<vmem>>, vector<16x32xf32>
    %c0_3 = arith.constant 0 : index
    %c0_4 = arith.constant 0 : index
    %2 = vector.load %arg3[%c0_3, %c0_4] : memref<32x64xf32, #tpu.memory_space<vmem>>, vector<32x64xf32>
    %cst = arith.constant dense<0.000000e+00> : vector<16x64xf32>
    %3 = tpu.matmul %0, %2, %cst {dimension_numbers = #tpu.dot_dimension_numbers<[1], [0], [0], [1], [0, 0, 1, 1], [], []>} : vector<16x32xf32>, vector<32x64xf32>, vector<16x64xf32> -> vector<16x64xf32>
    %4 = vector.extract_strided_slice %3 {offsets = [0, 0], sizes = [16, 32], strides = [1, 1]} : vector<16x64xf32> to vector<16x32xf32>
    %c0_5 = arith.constant 0 : index
    %c0_6 = arith.constant 0 : index
    %5 = vector.load %arg5[%c0_5, %c0_6] : memref<1x32xf32, #tpu.memory_space<vmem>>, vector<1x32xf32>
    %6 = vector.broadcast %5 : vector<1x32xf32> to vector<16x32xf32>
    %7 = arith.addf %4, %6 : vector<16x32xf32>
    %8 = vector.extract_strided_slice %3 {offsets = [0, 32], sizes = [16, 32], strides = [1, 1]} : vector<16x64xf32> to vector<16x32xf32>
    %c0_7 = arith.constant 0 : index
    %c0_8 = arith.constant 0 : index
    %9 = vector.load %arg4[%c0_7, %c0_8] : memref<32x32xf32, #tpu.memory_space<vmem>>, vector<32x32xf32>
    %cst_9 = arith.constant dense<0.000000e+00> : vector<16x32xf32>
    %10 = tpu.matmul %1, %9, %cst_9 {dimension_numbers = #tpu.dot_dimension_numbers<[1], [0], [0], [1], [0, 0, 1, 1], [], []>} : vector<16x32xf32>, vector<32x32xf32>, vector<16x32xf32> -> vector<16x32xf32>
    %11 = arith.addf %8, %10 : vector<16x32xf32>
    %c0_10 = arith.constant 0 : index
    %c0_11 = arith.constant 0 : index
    %12 = vector.load %arg6[%c0_10, %c0_11] : memref<1x32xf32, #tpu.memory_space<vmem>>, vector<1x32xf32>
    %13 = vector.broadcast %12 : vector<1x32xf32> to vector<16x32xf32>
    %14 = arith.addf %11, %13 : vector<16x32xf32>
    %15 = arith.negf %14 : vector<16x32xf32>
    %16 = math.exp %15 : vector<16x32xf32>
    %cst_12 = arith.constant 1.000000e+00 : f32
    %17 = vector.broadcast %cst_12 : f32 to vector<16x32xf32>
    %18 = arith.addf %17, %16 : vector<16x32xf32>
    %19 = arith.divf %17, %18 : vector<16x32xf32>
    %20 = arith.mulf %19, %7 : vector<16x32xf32>
    %21 = arith.addf %20, %1 : vector<16x32xf32>
    %cst_13 = arith.constant 0.000000e+00 : f32
    %22 = vector.broadcast %cst_13 : f32 to vector<16x64xf32>
    %23 = tpu.concatenate %21, %19, %22 in 1 : vector<16x32xf32>, vector<16x32xf32>, vector<16x64xf32> -> vector<16x128xf32>
    %c0_14 = arith.constant 0 : index
    %c0_15 = arith.constant 0 : index
    %24 = vector.load %arg7[%c0_14, %c0_15] : memref<16x128xf32, #tpu.memory_space<vmem>>, vector<16x128xf32>
    tpu.vector_store %arg7[%c0_14, %c0_15], %23 {strides = array<i32>} : memref<16x128xf32, #tpu.memory_space<vmem>>, vector<16x128xf32>,
    return
  }
  func.func @transform_0(%arg0: i32) -> (i32, i32) {
    %c0_i32 = arith.constant 0 : i32
    %c0_i32_0 = arith.constant 0 : i32
    return %arg0, %c0_i32 : i32, i32
  }
  func.func @transform_1(%arg0: i32) -> (i32, i32) {
    %c0_i32 = arith.constant 0 : i32
    %c0_i32_0 = arith.constant 0 : i32
    return %arg0, %c0_i32 : i32, i32
  }
  func.func @transform_2(%arg0: i32) -> (i32, i32) {
    %c0_i32 = arith.constant 0 : i32
    %c0_i32_0 = arith.constant 0 : i32
    %c0_i32_1 = arith.constant 0 : i32
    return %c0_i32, %c0_i32_0 : i32, i32
  }
  func.func @transform_3(%arg0: i32) -> (i32, i32) {
    %c0_i32 = arith.constant 0 : i32
    %c0_i32_0 = arith.constant 0 : i32
    %c0_i32_1 = arith.constant 0 : i32
    return %c0_i32, %c0_i32_0 : i32, i32
  }
  func.func @transform_4(%arg0: i32) -> (i32, i32) {
    %c0_i32 = arith.constant 0 : i32
    %c0_i32_0 = arith.constant 0 : i32
    %c0_i32_1 = arith.constant 0 : i32
    return %c0_i32, %c0_i32_0 : i32, i32
  }
  func.func @transform_5(%arg0: i32) -> (i32, i32) {
    %c0_i32 = arith.constant 0 : i32
    %c0_i32_0 = arith.constant 0 : i32
    %c0_i32_1 = arith.constant 0 : i32
    return %c0_i32, %c0_i32_0 : i32, i32
  }
  func.func @transform_6(%arg0: i32) -> (i32, i32) {
    %c0_i32 = arith.constant 0 : i32
    %c0_i32_0 = arith.constant 0 : i32
    return %arg0, %c0_i32 : i32, i32
  }
}

module attributes {stable_mosaic.version = 11 : i64} {
  func.func @_node_kernel_b(%arg0: i32, %arg1: memref<16x32xf32, #tpu.memory_space<vmem>>, %arg2: memref<16x32xf32, #tpu.memory_space<vmem>>, %arg3: memref<32x32xf32, #tpu.memory_space<vmem>>, %arg4: memref<1x32xf32, #tpu.memory_space<vmem>>, %arg5: memref<32x32xf32, #tpu.memory_space<vmem>>, %arg6: memref<1x32xf32, #tpu.memory_space<vmem>>, %arg7: memref<16x128xf32, #tpu.memory_space<vmem>>) attributes {dimension_semantics = [#tpu.dimension_semantics<parallel>], iteration_bounds = array<i64: 1>, scalar_prefetch = 0 : i64, scratch_operands = 0 : i64, tpu.core_type = #tpu.core_type<tc>, window_params = [{transform_indices = @transform_0, window_bounds = array<i64: 16, 32>}, {transform_indices = @transform_1, window_bounds = array<i64: 16, 32>}, {pipeline_mode = #tpu.pipeline_mode<synchronous>, transform_indices = @transform_2, window_bounds = array<i64: 32, 32>}, {pipeline_mode = #tpu.pipeline_mode<synchronous>, transform_indices = @transform_3, window_bounds = array<i64: 1, 32>}, {pipeline_mode = #tpu.pipeline_mode<synchronous>, transform_indices = @transform_4, window_bounds = array<i64: 32, 32>}, {pipeline_mode = #tpu.pipeline_mode<synchronous>, transform_indices = @transform_5, window_bounds = array<i64: 1, 32>}, {transform_indices = @transform_6, window_bounds = array<i64: 16, 128>}]} {
    %c0 = arith.constant 0 : index
    %c0_0 = arith.constant 0 : index
    %0 = vector.load %arg1[%c0, %c0_0] : memref<16x32xf32, #tpu.memory_space<vmem>>, vector<16x32xf32>
    %c0_1 = arith.constant 0 : index
    %c0_2 = arith.constant 0 : index
    %1 = vector.load %arg2[%c0_1, %c0_2] : memref<16x32xf32, #tpu.memory_space<vmem>>, vector<16x32xf32>
    %c0_3 = arith.constant 0 : index
    %c0_4 = arith.constant 0 : index
    %2 = vector.load %arg3[%c0_3, %c0_4] : memref<32x32xf32, #tpu.memory_space<vmem>>, vector<32x32xf32>
    %cst = arith.constant dense<0.000000e+00> : vector<16x32xf32>
    %3 = tpu.matmul %0, %2, %cst {dimension_numbers = #tpu.dot_dimension_numbers<[1], [0], [0], [1], [0, 0, 1, 1], [], []>} : vector<16x32xf32>, vector<32x32xf32>, vector<16x32xf32> -> vector<16x32xf32>
    %c0_5 = arith.constant 0 : index
    %c0_6 = arith.constant 0 : index
    %4 = vector.load %arg4[%c0_5, %c0_6] : memref<1x32xf32, #tpu.memory_space<vmem>>, vector<1x32xf32>
    %5 = vector.broadcast %4 : vector<1x32xf32> to vector<16x32xf32>
    %6 = arith.addf %3, %5 : vector<16x32xf32>
    %cst_7 = arith.constant 0.000000e+00 : f32
    %7 = vector.broadcast %cst_7 : f32 to vector<16x32xf32>
    %8 = arith.cmpf oge, %6, %7 : vector<16x32xf32>
    %cst_8 = arith.constant 0.00999999977 : f32
    %9 = vector.broadcast %cst_8 : f32 to vector<16x32xf32>
    %10 = arith.mulf %9, %6 : vector<16x32xf32>
    %11 = arith.select %8, %6, %10 : vector<16x32xi1>, vector<16x32xf32>
    %c0_9 = arith.constant 0 : index
    %c0_10 = arith.constant 0 : index
    %12 = vector.load %arg5[%c0_9, %c0_10] : memref<32x32xf32, #tpu.memory_space<vmem>>, vector<32x32xf32>
    %cst_11 = arith.constant dense<0.000000e+00> : vector<16x32xf32>
    %13 = tpu.matmul %11, %12, %cst_11 {dimension_numbers = #tpu.dot_dimension_numbers<[1], [0], [0], [1], [0, 0, 1, 1], [], []>} : vector<16x32xf32>, vector<32x32xf32>, vector<16x32xf32> -> vector<16x32xf32>
    %c0_12 = arith.constant 0 : index
    %c0_13 = arith.constant 0 : index
    %14 = vector.load %arg6[%c0_12, %c0_13] : memref<1x32xf32, #tpu.memory_space<vmem>>, vector<1x32xf32>
    %15 = vector.broadcast %14 : vector<1x32xf32> to vector<16x32xf32>
    %16 = arith.addf %13, %15 : vector<16x32xf32>
    %17 = arith.mulf %1, %16 : vector<16x32xf32>
    %18 = arith.addf %17, %0 : vector<16x32xf32>
    %cst_14 = arith.constant 0.000000e+00 : f32
    %19 = vector.broadcast %cst_14 : f32 to vector<16x96xf32>
    %20 = tpu.concatenate %18, %19 in 1 : vector<16x32xf32>, vector<16x96xf32> -> vector<16x128xf32>
    %c0_15 = arith.constant 0 : index
    %c0_16 = arith.constant 0 : index
    %21 = vector.load %arg7[%c0_15, %c0_16] : memref<16x128xf32, #tpu.memory_space<vmem>>, vector<16x128xf32>
    tpu.vector_store %arg7[%c0_15, %c0_16], %20 {strides = array<i32>} : memref<16x128xf32, #tpu.memory_space<vmem>>, vector<16x128xf32>,
    return
  }
  func.func @transform_0(%arg0: i32) -> (i32, i32) {
    %c0_i32 = arith.constant 0 : i32
    %c0_i32_0 = arith.constant 0 : i32
    return %arg0, %c0_i32 : i32, i32
  }
  func.func @transform_1(%arg0: i32) -> (i32, i32) {
    %c0_i32 = arith.constant 0 : i32
    %c0_i32_0 = arith.constant 0 : i32
    return %arg0, %c0_i32 : i32, i32
  }
  func.func @transform_2(%arg0: i32) -> (i32, i32) {
    %c0_i32 = arith.constant 0 : i32
    %c0_i32_0 = arith.constant 0 : i32
    %c0_i32_1 = arith.constant 0 : i32
    return %c0_i32, %c0_i32_0 : i32, i32
  }
  func.func @transform_3(%arg0: i32) -> (i32, i32) {
    %c0_i32 = arith.constant 0 : i32
    %c0_i32_0 = arith.constant 0 : i32
    %c0_i32_1 = arith.constant 0 : i32
    return %c0_i32, %c0_i32_0 : i32, i32
  }
  func.func @transform_4(%arg0: i32) -> (i32, i32) {
    %c0_i32 = arith.constant 0 : i32
    %c0_i32_0 = arith.constant 0 : i32
    %c0_i32_1 = arith.constant 0 : i32
    return %c0_i32, %c0_i32_0 : i32, i32
  }
  func.func @transform_5(%arg0: i32) -> (i32, i32) {
    %c0_i32 = arith.constant 0 : i32
    %c0_i32_0 = arith.constant 0 : i32
    %c0_i32_1 = arith.constant 0 : i32
    return %c0_i32, %c0_i32_0 : i32, i32
  }
  func.func @transform_6(%arg0: i32) -> (i32, i32) {
    %c0_i32 = arith.constant 0 : i32
    %c0_i32_0 = arith.constant 0 : i32
    return %arg0, %c0_i32 : i32, i32
  }
}

</mosaic_0001>

<llo_original>
// kernel: egnn_forward.4
$region0: #{egnn_forward.4}
  #allocation0 [shape = 'u32[]', space=smem, size = 0x4, offset = 0x4, fixed_abs, tag = 'smem constant byte address 0x4 - core index']
  #allocation1 [shape = 'u32[144,128]{1,0:T(1,128)}', space=vmem, size = 0x12000, scoped, tag = 'internal scratch']
  %s0 = inlined_call_operand.vmem [shape: f32[16,32], index: 0, kind: input, shape index: {}]
  %s1 = inlined_call_operand.vmem [shape: f32[16,32], index: 1, kind: input, shape index: {}]
  %s2 = inlined_call_operand.vmem [shape: f32[32,64], index: 2, kind: input, shape index: {}]
  %s3 = inlined_call_operand.vmem [shape: f32[32,32], index: 3, kind: input, shape index: {}]
  %s4 = inlined_call_operand.vmem [shape: f32[1,32], index: 4, kind: input, shape index: {}]
  %s5 = inlined_call_operand.vmem [shape: f32[1,32], index: 5, kind: input, shape index: {}]
  %s6 = inlined_call_operand.vmem [shape: f32[16,128], index: 6, kind: output, shape index: {}]
  %s7 = sld [smem:[#allocation0]]
  $region34: #{egnn_forward.4} parent=0
    _
  %s9 = ssub.s32 1, %s7
  %s10 = scalar_select 0, %s9, %s7
  // Predicated region
  $region2: #{egnn_forward.4} parent=0 // pred_check
    _
  $region3: #{egnn_forward.4} parent=0 // pred_check_branch
    %12 = sbr.rel (0) target = $region5
  $region4: #{egnn_forward.4} parent=0 // pred_region
    _
  $region5: #{egnn_forward.4} parent=0 // pred_fallthru
    _
  // Predicated region
  $region6: #{egnn_forward.4} parent=0 // pred_check
    _
  $region7: #{egnn_forward.4} parent=0 // pred_check_branch
    %14 = sbr.rel (0) target = $region9
  $region8: #{egnn_forward.4} parent=0 // pred_region
    _
  $region9: #{egnn_forward.4} parent=0 // pred_fallthru
    _
  // Predicated region
  $region10: #{egnn_forward.4} parent=0 // pred_check
    _
  $region11: #{egnn_forward.4} parent=0 // pred_check_branch
    %16 = sbr.rel (0) target = $region13
  $region12: #{egnn_forward.4} parent=0 // pred_region
    _
  $region13: #{egnn_forward.4} parent=0 // pred_fallthru
    _
  // Predicated region
  $region14: #{egnn_forward.4} parent=0 // pred_check
    _
  $region15: #{egnn_forward.4} parent=0 // pred_check_branch
    %18 = sbr.rel (0) target = $region17
  $region16: #{egnn_forward.4} parent=0 // pred_region
    _
  $region17: #{egnn_forward.4} parent=0 // pred_fallthru
    _
  // Predicated region
  $region18: #{egnn_forward.4} parent=0 // pred_check
    _
  $region19: #{egnn_forward.4} parent=0 // pred_check_branch
    %20 = sbr.rel (0) target = $region21
  $region20: #{egnn_forward.4} parent=0 // pred_region
    _
  $region21: #{egnn_forward.4} parent=0 // pred_fallthru
    _
  // Predicated region
  $region22: #{egnn_forward.4} parent=0 // pred_check
    _
  $region23: #{egnn_forward.4} parent=0 // pred_check_branch
    %22 = sbr.rel (0) target = $region25
  $region24: #{egnn_forward.4} parent=0 // pred_region
    _
  $region25: #{egnn_forward.4} parent=0 // pred_fallthru
    _
  %v23 = vld [vmem:[%s0] sm:$0xff]
  %v24 = vld [vmem:[%s0 + $0x8] sm:$0xff]
  %v25 = vld [vmem:[%s1] sm:$0xff]
  %v26 = vld [vmem:[%s1 + $0x8] sm:$0xff]
  %v27 = vld [vmem:[%s2] sm:$0xff]
  %v28 = vld [vmem:[%s2 + $0x8] sm:$0xff]
  %v29 = vld [vmem:[%s2 + $0x10] sm:$0xff]
  %v30 = vld [vmem:[%s2 + $0x18] sm:$0xff]
  %vm31 = vcmask 261120
  %v33 = vsel %vm31, %v23, 0
  %v36 = vsel %vm31, %v24, 0
  %38 = vmatprep.subr.mxu0 0.0
  %39 = vmatpush1.msra.mxu0 %v27
  %40 = vmatprep.subr.mxu0 0.0
  %41 = vmatpush1.msra.mxu0 %v28
  %42 = vmatprep.subr.mxu0 0.0
  %43 = vmatpush1.msra.mxu0 %v29
  %44 = vmatprep.subr.mxu0 0.0
  %45 = vmatpush1.msra.mxu0 %v30
  %46 = vmatprep.subr.mxu0 0.0
  %47 = vmatpush1.msra.mxu0 0.0
  %48 = vmatprep.subr.mxu0 0.0
  %49 = vmatpush1.msra.mxu0 0.0
  %50 = vmatprep.subr.mxu0 0.0
  %51 = vmatpush1.msra.mxu0 0.0
  %52 = vmatprep.subr.mxu0 0.0
  %53 = vmatpush1.msra.mxu0 0.0
  %54 = vmatprep.subr.mxu0 0.0
  %55 = vmatpush1.msra.mxu0 0.0
  %56 = vmatprep.subr.mxu0 0.0
  %57 = vmatpush1.msra.mxu0 0.0
  %58 = vmatprep.subr.mxu0 0.0
  %59 = vmatpush1.msra.mxu0 0.0
  %60 = vmatprep.subr.mxu0 0.0
  %61 = vmatpush1.msra.mxu0 0.0
  %62 = vmatprep.subr.mxu0 0.0
  %63 = vmatpush1.msra.mxu0 0.0
  %64 = vmatprep.subr.mxu0 0.0
  %65 = vmatpush1.msra.mxu0 0.0
  %66 = vmatprep.subr.mxu0 0.0
  %67 = vmatpush1.msra.mxu0 0.0
  %68 = vmatprep.subr.mxu0 0.0
  %69 = vmatpush1.msra.mxu0 0.0
  %70 = vmatprep.subr.mxu0 0.0
  %71 = vmatpush1.msra.mxu0 0.0
  %72 = vmatprep.subr.mxu0 0.0
  %73 = vmatpush1.msra.mxu0 0.0
  %74 = vmatprep.subr.mxu0 0.0
  %75 = vmatpush1.msra.mxu0 0.0
  %76 = vmatprep.subr.mxu0 0.0
  %77 = vmatpush1.msra.mxu0 0.0
  %78 = vmatprep.subr.mxu0 0.0
  %79 = vmatpush1.msra.mxu0 0.0
  %80 = vmatprep.subr.mxu0 0.0
  %81 = vmatpush1.msra.mxu0 0.0
  %82 = vmatprep.subr.mxu0 0.0
  %83 = vmatpush1.msra.mxu0 0.0
  %84 = vmatprep.subr.mxu0 0.0
  %85 = vmatpush1.msra.mxu0 0.0
  %86 = vmatprep.subr.mxu0 0.0
  %87 = vmatpush1.msra.mxu0 0.0
  %88 = vmatprep.subr.mxu0 0.0
  %89 = vmatpush1.msra.mxu0 0.0
  %90 = vmatprep.subr.mxu0 0.0
  %91 = vmatpush1.msra.mxu0 0.0
  %92 = vmatprep.subr.mxu0 0.0
  %93 = vmatpush1.msra.mxu0 0.0
  %94 = vmatprep.subr.mxu0 0.0
  %95 = vmatpush1.msra.mxu0 0.0
  %96 = vmatprep.subr.mxu0 0.0
  %97 = vmatpush1.msra.mxu0 0.0
  %98 = vmatprep.subr.mxu0 0.0
  %99 = vmatpush1.msra.mxu0 0.0
  %100 = vmatprep.subr.mxu0 0.0
  %101 = vmatpush1.msra.mxu0 0.0
  %102 = vmatprep.mubr.f32.mxu0 0.0
  %103 = vmatmul.mubr.f32.gmra.mrb[0].mxu0 %v33
  %v104 = vpop.f32.mrb[0].mxu0
  %v105 = vadd.f32 0.0, %v104
  %v106 = vpop.f32.mrb[0].mxu0
  %107 = vmatprep.mubr.f32.mxu0 0.0
  %108 = vmatmul.mubr.f32.gmra.mrb[0].mxu0 %v36
  %v109 = vpop.f32.mrb[0].mxu0
  %v110 = vadd.f32 0.0, %v109
  %v111 = vpop.f32.mrb[0].mxu0
  %112 = vdwg.mxu0
  %v113 = vld [vmem:[%s4] sm:$0x1]
  %v115 = vlaneseq
  %v116 = vshrl.u32 %v115, 7
  %v117 = vsub.s32 0, %v116
  %v118 = vrot.slane %v113, %v117
  %v120 = vadd.f32 %v105, %v118
  %v121 = vadd.f32 %v110, %v118
  %v122 = vld [vmem:[%s3] sm:$0xff]
  %v123 = vld [vmem:[%s3 + $0x8] sm:$0xff]
  %v124 = vld [vmem:[%s3 + $0x10] sm:$0xff]
  %v125 = vld [vmem:[%s3 + $0x18] sm:$0xff]
  %v127 = vsel %vm31, %v25, 0
  %v130 = vsel %vm31, %v26, 0
  %132 = vmatprep.subr.mxu0 0.0
  %133 = vmatpush1.msra.mxu0 %v122
  %134 = vmatprep.subr.mxu0 0.0
  %135 = vmatpush1.msra.mxu0 %v123
  %136 = vmatprep.subr.mxu0 0.0
  %137 = vmatpush1.msra.mxu0 %v124
  %138 = vmatprep.subr.mxu0 0.0
  %139 = vmatpush1.msra.mxu0 %v125
  %140 = vmatprep.subr.mxu0 0.0
  %141 = vmatpush1.msra.mxu0 0.0
  %142 = vmatprep.subr.mxu0 0.0
  %143 = vmatpush1.msra.mxu0 0.0
  %144 = vmatprep.subr.mxu0 0.0
  %145 = vmatpush1.msra.mxu0 0.0
  %146 = vmatprep.subr.mxu0 0.0
  %147 = vmatpush1.msra.mxu0 0.0
  %148 = vmatprep.subr.mxu0 0.0
  %149 = vmatpush1.msra.mxu0 0.0
  %150 = vmatprep.subr.mxu0 0.0
  %151 = vmatpush1.msra.mxu0 0.0
  %152 = vmatprep.subr.mxu0 0.0
  %153 = vmatpush1.msra.mxu0 0.0
  %154 = vmatprep.subr.mxu0 0.0
  %155 = vmatpush1.msra.mxu0 0.0
  %156 = vmatprep.subr.mxu0 0.0
  %157 = vmatpush1.msra.mxu0 0.0
  %158 = vmatprep.subr.mxu0 0.0
  %159 = vmatpush1.msra.mxu0 0.0
  %160 = vmatprep.subr.mxu0 0.0
  %161 = vmatpush1.msra.mxu0 0.0
  %162 = vmatprep.subr.mxu0 0.0
  %163 = vmatpush1.msra.mxu0 0.0
  %164 = vmatprep.subr.mxu0 0.0
  %165 = vmatpush1.msra.mxu0 0.0
  %166 = vmatprep.subr.mxu0 0.0
  %167 = vmatpush1.msra.mxu0 0.0
  %168 = vmatprep.subr.mxu0 0.0
  %169 = vmatpush1.msra.mxu0 0.0
  %170 = vmatprep.subr.mxu0 0.0
  %171 = vmatpush1.msra.mxu0 0.0
  %172 = vmatprep.subr.mxu0 0.0
  %173 = vmatpush1.msra.mxu0 0.0
  %174 = vmatprep.subr.mxu0 0.0
  %175 = vmatpush1.msra.mxu0 0.0
  %176 = vmatprep.subr.mxu0 0.0
  %177 = vmatpush1.msra.mxu0 0.0
  %178 = vmatprep.subr.mxu0 0.0
  %179 = vmatpush1.msra.mxu0 0.0
  %180 = vmatprep.subr.mxu0 0.0
  %181 = vmatpush1.msra.mxu0 0.0
  %182 = vmatprep.subr.mxu0 0.0
  %183 = vmatpush1.msra.mxu0 0.0
  %184 = vmatprep.subr.mxu0 0.0
  %185 = vmatpush1.msra.mxu0 0.0
  %186 = vmatprep.subr.mxu0 0.0
  %187 = vmatpush1.msra.mxu0 0.0
  %188 = vmatprep.subr.mxu0 0.0
  %189 = vmatpush1.msra.mxu0 0.0
  %190 = vmatprep.subr.mxu0 0.0
  %191 = vmatpush1.msra.mxu0 0.0
  %192 = vmatprep.subr.mxu0 0.0
  %193 = vmatpush1.msra.mxu0 0.0
  %194 = vmatprep.subr.mxu0 0.0
  %195 = vmatpush1.msra.mxu0 0.0
  %196 = vmatprep.mubr.f32.mxu0 0.0
  %197 = vmatmul.mubr.f32.gmra.mrb[0].mxu0 %v127
  %v198 = vpop.f32.mrb[0].mxu0
  %v199 = vadd.f32 0.0, %v198
  %v200 = vpop.f32.mrb[0].mxu0
  %201 = vmatprep.mubr.f32.mxu0 0.0
  %202 = vmatmul.mubr.f32.gmra.mrb[0].mxu0 %v130
  %v203 = vpop.f32.mrb[0].mxu0
  %v204 = vadd.f32 0.0, %v203
  %v205 = vpop.f32.mrb[0].mxu0
  %206 = vdwg.mxu0
  %209 = vrot.lane.b32.xlu0 %v199, 32
  %v210 = vpop.permute.xlu0 %209
  %211 = vrot.lane.b32.xlu0 %v204, 32
  %v212 = vpop.permute.xlu0 %211
  %v215 = vadd.f32 %v105, %v210
  %v216 = vadd.f32 %v110, %v212
  %v217 = vld [vmem:[%s5] sm:$0x1]
  %v219 = vlaneseq
  %v220 = vshrl.u32 %v219, 7
  %v221 = vsub.s32 0, %v220
  %v222 = vrot.slane %v217, %v221
  %223 = vrot.lane.b32.xlu0 %v222, 32
  %v224 = vpop.permute.xlu0 %223
  %v226 = vadd.f32 %v215, %v224
  %v227 = vadd.f32 %v216, %v224
  %v228 = vxor.u32 %v226, 2147483648
  %v229 = vxor.u32 %v227, 2147483648
  %v230 = vmul.f32 %v228, 1.442695
  %v231 = vpow.pop %v230
  %v232 = vmul.f32 %v229, 1.442695
  %v233 = vpow.pop %v232
  %v234 = vadd.f32 %v231, 1.0
  %v235 = vadd.f32 %v233, 1.0
  %v236 = vrcp.pop %v234
  %v237 = vmul.f32 1.0, %v236
  %v238 = vrcp.pop %v235
  %v239 = vmul.f32 1.0, %v238
  %242 = vrot.lane.b32.xlu0 %v120, 32
  %v243 = vpop.permute.xlu0 %242
  %244 = vrot.lane.b32.xlu0 %v121, 32
  %v245 = vpop.permute.xlu0 %244
  %v248 = vmul.f32 %v237, %v243
  %v249 = vmul.f32 %v239, %v245
  %250 = vrot.lane.b32.xlu0 %v25, 32
  %v251 = vpop.permute.xlu0 %250
  %252 = vrot.lane.b32.xlu0 %v26, 32
  %v253 = vpop.permute.xlu0 %252
  %v256 = vadd.f32 %v248, %v251
  %v257 = vadd.f32 %v249, %v253
  %260 = vrot.lane.b32.xlu0 %v256, 96
  %v261 = vpop.permute.xlu0 %260
  %262 = vrot.lane.b32.xlu0 %v257, 96
  %v263 = vpop.permute.xlu0 %262
  %v266 = vsel %vm31, %v261, %v237
  %v267 = vsel %vm31, %v263, %v239
  %vm268 = vcmask 523264
  %v269 = vsel %vm268, %v266, 0.0
  %v270 = vsel %vm268, %v267, 0.0
  %271 = vst [vmem:[%s6] sm:$0xff] %v269
  %272 = vst [vmem:[%s6 + $0x8] sm:$0xff] %v270
  // Predicated region
  $region26: #{egnn_forward.4} parent=0 // pred_check
    _
  $region27: #{egnn_forward.4} parent=0 // pred_check_branch
    %274 = sbr.rel (0) target = $region29
  $region28: #{egnn_forward.4} parent=0 // pred_region
    _
  $region29: #{egnn_forward.4} parent=0 // pred_fallthru
    _
  // Predicated region
  $region30: #{egnn_forward.4} parent=0 // pred_check
    _
  $region31: #{egnn_forward.4} parent=0 // pred_check_branch
    %276 = sbr.rel (0) target = $region33
  $region32: #{egnn_forward.4} parent=0 // pred_region
    _
  $region33: #{egnn_forward.4} parent=0 // pred_fallthru
    _

// kernel: egnn_forward.3
$region0: #{egnn_forward.3}
  #allocation0 [shape = 'u32[]', space=smem, size = 0x4, offset = 0x4, fixed_abs, tag = 'smem constant byte address 0x4 - core index']
  #allocation1 [shape = 'u32[144,128]{1,0:T(1,128)}', space=vmem, size = 0x12000, scoped, tag = 'internal scratch']
  %s0 = inlined_call_operand.vmem [shape: f32[64,104], index: 0, kind: input, shape index: {}]
  %s1 = inlined_call_operand.vmem [shape: f32[104,192], index: 1, kind: input, shape index: {}]
  %s2 = inlined_call_operand.vmem [shape: f32[32,32], index: 2, kind: input, shape index: {}]
  %s3 = inlined_call_operand.vmem [shape: f32[32,32], index: 3, kind: input, shape index: {}]
  %s4 = inlined_call_operand.vmem [shape: f32[1,32], index: 4, kind: input, shape index: {}]
  %s5 = inlined_call_operand.vmem [shape: f32[32,32], index: 5, kind: input, shape index: {}]
  %s6 = inlined_call_operand.vmem [shape: f32[32,8], index: 6, kind: input, shape index: {}]
  %s7 = inlined_call_operand.vmem [shape: f32[1,8], index: 7, kind: input, shape index: {}]
  %s8 = inlined_call_operand.vmem [shape: f32[32,32], index: 8, kind: input, shape index: {}]
  %s9 = inlined_call_operand.vmem [shape: f32[1,32], index: 9, kind: input, shape index: {}]
  %s10 = inlined_call_operand.vmem [shape: f32[8,32], index: 10, kind: input, shape index: {}]
  %s11 = inlined_call_operand.vmem [shape: f32[64,128], index: 11, kind: output, shape index: {}]
  %s12 = sld [smem:[#allocation0]]
  $region54: #{egnn_forward.3} parent=0
    _
  %s14 = ssub.s32 1, %s12
  %s15 = scalar_select 0, %s14, %s12
  // Predicated region
  $region2: #{egnn_forward.3} parent=0 // pred_check
    _
  $region3: #{egnn_forward.3} parent=0 // pred_check_branch
    %17 = sbr.rel (0) target = $region5
  $region4: #{egnn_forward.3} parent=0 // pred_region
    _
  $region5: #{egnn_forward.3} parent=0 // pred_fallthru
    _
  // Predicated region
  $region6: #{egnn_forward.3} parent=0 // pred_check
    _
  $region7: #{egnn_forward.3} parent=0 // pred_check_branch
    %19 = sbr.rel (0) target = $region9
  $region8: #{egnn_forward.3} parent=0 // pred_region
    _
  $region9: #{egnn_forward.3} parent=0 // pred_fallthru
    _
  // Predicated region
  $region10: #{egnn_forward.3} parent=0 // pred_check
    _
  $region11: #{egnn_forward.3} parent=0 // pred_check_branch
    %21 = sbr.rel (0) target = $region13
  $region12: #{egnn_forward.3} parent=0 // pred_region
    _
  $region13: #{egnn_forward.3} parent=0 // pred_fallthru
    _
  // Predicated region
  $region14: #{egnn_forward.3} parent=0 // pred_check
    _
  $region15: #{egnn_forward.3} parent=0 // pred_check_branch
    %23 = sbr.rel (0) target = $region17
  $region16: #{egnn_forward.3} parent=0 // pred_region
    _
  $region17: #{egnn_forward.3} parent=0 // pred_fallthru
    _
  // Predicated region
  $region18: #{egnn_forward.3} parent=0 // pred_check
    _
  $region19: #{egnn_forward.3} parent=0 // pred_check_branch
    %25 = sbr.rel (0) target = $region21
  $region20: #{egnn_forward.3} parent=0 // pred_region
    _
  $region21: #{egnn_forward.3} parent=0 // pred_fallthru
    _
  // Predicated region
  $region22: #{egnn_forward.3} parent=0 // pred_check
    _
  $region23: #{egnn_forward.3} parent=0 // pred_check_branch
    %27 = sbr.rel (0) target = $region25
  $region24: #{egnn_forward.3} parent=0 // pred_region
    _
  $region25: #{egnn_forward.3} parent=0 // pred_fallthru
    _
  // Predicated region
  $region26: #{egnn_forward.3} parent=0 // pred_check
    _
  $region27: #{egnn_forward.3} parent=0 // pred_check_branch
    %29 = sbr.rel (0) target = $region29
  $region28: #{egnn_forward.3} parent=0 // pred_region
    _
  $region29: #{egnn_forward.3} parent=0 // pred_fallthru
    _
  // Predicated region
  $region30: #{egnn_forward.3} parent=0 // pred_check
    _
  $region31: #{egnn_forward.3} parent=0 // pred_check_branch
    %31 = sbr.rel (0) target = $region33
  $region32: #{egnn_forward.3} parent=0 // pred_region
    _
  $region33: #{egnn_forward.3} parent=0 // pred_fallthru
    _
  // Predicated region
  $region34: #{egnn_forward.3} parent=0 // pred_check
    _
  $region35: #{egnn_forward.3} parent=0 // pred_check_branch
    %33 = sbr.rel (0) target = $region37
  $region36: #{egnn_forward.3} parent=0 // pred_region
    _
  $region37: #{egnn_forward.3} parent=0 // pred_fallthru
    _
  // Predicated region
  $region38: #{egnn_forward.3} parent=0 // pred_check
    _
  $region39: #{egnn_forward.3} parent=0 // pred_check_branch
    %35 = sbr.rel (0) target = $region41
  $region40: #{egnn_forward.3} parent=0 // pred_region
    _
  $region41: #{egnn_forward.3} parent=0 // pred_fallthru
    _
  // Predicated region
  $region42: #{egnn_forward.3} parent=0 // pred_check
    _
  $region43: #{egnn_forward.3} parent=0 // pred_check_branch
    %37 = sbr.rel (0) target = $region45
  $region44: #{egnn_forward.3} parent=0 // pred_region
    _
  $region45: #{egnn_forward.3} parent=0 // pred_fallthru
    _
  %v38 = vld [vmem:[%s0] sm:$0xff]
  %v39 = vld [vmem:[%s0 + $0x8] sm:$0xff]
  %v40 = vld [vmem:[%s0 + $0x10] sm:$0xff]
  %v41 = vld [vmem:[%s0 + $0x18] sm:$0xff]
  %v42 = vld [vmem:[%s0 + $0x20] sm:$0xff]
  %v43 = vld [vmem:[%s0 + $0x28] sm:$0xff]
  %v44 = vld [vmem:[%s0 + $0x30] sm:$0xff]
  %v45 = vld [vmem:[%s0 + $0x38] sm:$0xff]
  %v46 = vld [vmem:[%s1] sm:$0xff]
  %v47 = vld [vmem:[%s1 + $0x8] sm:$0xff]
  %v48 = vld [vmem:[%s1 + $0x10] sm:$0xff]
  %v49 = vld [vmem:[%s1 + $0x18] sm:$0xff]
  %v50 = vld [vmem:[%s1 + $0x20] sm:$0xff]
  %v51 = vld [vmem:[%s1 + $0x28] sm:$0xff]
  %v52 = vld [vmem:[%s1 + $0x30] sm:$0xff]
  %v53 = vld [vmem:[%s1 + $0x38] sm:$0xff]
  %v54 = vld [vmem:[%s1 + $0x40] sm:$0xff]
  %v55 = vld [vmem:[%s1 + $0x48] sm:$0xff]
  %v56 = vld [vmem:[%s1 + $0x50] sm:$0xff]
  %v57 = vld [vmem:[%s1 + $0x58] sm:$0xff]
  %v58 = vld [vmem:[%s1 + $0x60] sm:$0xff]
  %v59 = vld [vmem:[%s1 + $0x68] sm:$0xff]
  %v60 = vld [vmem:[%s1 + $0x70] sm:$0xff]
  %v61 = vld [vmem:[%s1 + $0x78] sm:$0xff]
  %v62 = vld [vmem:[%s1 + $0x80] sm:$0xff]
  %v63 = vld [vmem:[%s1 + $0x88] sm:$0xff]
  %v64 = vld [vmem:[%s1 + $0x90] sm:$0xff]
  %v65 = vld [vmem:[%s1 + $0x98] sm:$0xff]
  %v66 = vld [vmem:[%s1 + $0xa0] sm:$0xff]
  %v67 = vld [vmem:[%s1 + $0xa8] sm:$0xff]
  %v68 = vld [vmem:[%s1 + $0xb0] sm:$0xff]
  %v69 = vld [vmem:[%s1 + $0xb8] sm:$0xff]
  %v70 = vld [vmem:[%s1 + $0xc0] sm:$0xff]
  %v71 = vld [vmem:[%s1 + $0xc8] sm:$0xff]
  %vm72 = vcmask 850944
  %v74 = vsel %vm72, %v38, 0
  %v77 = vsel %vm72, %v39, 0
  %v80 = vsel %vm72, %v40, 0
  %v83 = vsel %vm72, %v41, 0
  %v86 = vsel %vm72, %v42, 0
  %v89 = vsel %vm72, %v43, 0
  %v92 = vsel %vm72, %v44, 0
  %v95 = vsel %vm72, %v45, 0
  %97 = vmatprep.subr.mxu0 %v47
  %98 = vmatpush1.msra.mxu0 %v46
  %99 = vmatprep.subr.mxu0 %v49
  %100 = vmatpush1.msra.mxu0 %v48
  %101 = vmatprep.subr.mxu0 %v51
  %102 = vmatpush1.msra.mxu0 %v50
  %103 = vmatprep.subr.mxu0 %v53
  %104 = vmatpush1.msra.mxu0 %v52
  %105 = vmatprep.subr.mxu0 %v55
  %106 = vmatpush1.msra.mxu0 %v54
  %107 = vmatprep.subr.mxu0 %v57
  %108 = vmatpush1.msra.mxu0 %v56
  %109 = vmatprep.subr.mxu0 %v59
  %110 = vmatpush1.msra.mxu0 %v58
  %111 = vmatprep.subr.mxu0 %v61
  %112 = vmatpush1.msra.mxu0 %v60
  %113 = vmatprep.subr.mxu0 %v63
  %114 = vmatpush1.msra.mxu0 %v62
  %115 = vmatprep.subr.mxu0 %v65
  %116 = vmatpush1.msra.mxu0 %v64
  %117 = vmatprep.subr.mxu0 %v67
  %118 = vmatpush1.msra.mxu0 %v66
  %119 = vmatprep.subr.mxu0 %v69
  %120 = vmatpush1.msra.mxu0 %v68
  %121 = vmatprep.subr.mxu0 %v71
  %122 = vmatpush1.msra.mxu0 %v70
  %123 = vmatprep.subr.mxu0 0.0
  %124 = vmatpush1.msra.mxu0 0.0
  %125 = vmatprep.subr.mxu0 0.0
  %126 = vmatpush1.msra.mxu0 0.0
  %127 = vmatprep.subr.mxu0 0.0
  %128 = vmatpush1.msra.mxu0 0.0
  %129 = vmatprep.subr.mxu0 0.0
  %130 = vmatpush1.msra.mxu0 0.0
  %131 = vmatprep.subr.mxu0 0.0
  %132 = vmatpush1.msra.mxu0 0.0
  %133 = vmatprep.subr.mxu0 0.0
  %134 = vmatpush1.msra.mxu0 0.0
  %135 = vmatprep.subr.mxu0 0.0
  %136 = vmatpush1.msra.mxu0 0.0
  %137 = vmatprep.subr.mxu0 0.0
  %138 = vmatpush1.msra.mxu0 0.0
  %139 = vmatprep.subr.mxu0 0.0
  %140 = vmatpush1.msra.mxu0 0.0
  %141 = vmatprep.subr.mxu0 0.0
  %142 = vmatpush1.msra.mxu0 0.0
  %143 = vmatprep.subr.mxu0 0.0
  %144 = vmatpush1.msra.mxu0 0.0
  %145 = vmatprep.subr.mxu0 0.0
  %146 = vmatpush1.msra.mxu0 0.0
  %147 = vmatprep.subr.mxu0 0.0
  %148 = vmatpush1.msra.mxu0 0.0
  %149 = vmatprep.subr.mxu0 0.0
  %150 = vmatpush1.msra.mxu0 0.0
  %151 = vmatprep.subr.mxu0 0.0
  %152 = vmatpush1.msra.mxu0 0.0
  %153 = vmatprep.subr.mxu0 0.0
  %154 = vmatpush1.msra.mxu0 0.0
  %155 = vmatprep.subr.mxu0 0.0
  %156 = vmatpush1.msra.mxu0 0.0
  %157 = vmatprep.subr.mxu0 0.0
  %158 = vmatpush1.msra.mxu0 0.0
  %159 = vmatprep.subr.mxu0 0.0
  %160 = vmatpush1.msra.mxu0 0.0
  %161 = vmatprep.mubr.f32.mxu0 0.0
  %162 = vmatmul.mubr.f32.gmra.mrb[0].mxu0 %v74
  %v163 = vpop.f32.mrb[0].mxu0
  %v164 = vadd.f32 0.0, %v163
  %v165 = vpop.f32.mrb[0].mxu0
  %v166 = vadd.f32 0.0, %v165
  %167 = vmatprep.mubr.f32.mxu0 0.0
  %168 = vmatmul.mubr.f32.gmra.mrb[0].mxu0 %v77
  %v169 = vpop.f32.mrb[0].mxu0
  %v170 = vadd.f32 0.0, %v169
  %v171 = vpop.f32.mrb[0].mxu0
  %v172 = vadd.f32 0.0, %v171
  %173 = vmatprep.mubr.f32.mxu0 0.0
  %174 = vmatmul.mubr.f32.gmra.mrb[0].mxu0 %v80
  %v175 = vpop.f32.mrb[0].mxu0
  %v176 = vadd.f32 0.0, %v175
  %v177 = vpop.f32.mrb[0].mxu0
  %v178 = vadd.f32 0.0, %v177
  %179 = vmatprep.mubr.f32.mxu0 0.0
  %180 = vmatmul.mubr.f32.gmra.mrb[0].mxu0 %v83
  %v181 = vpop.f32.mrb[0].mxu0
  %v182 = vadd.f32 0.0, %v181
  %v183 = vpop.f32.mrb[0].mxu0
  %v184 = vadd.f32 0.0, %v183
  %185 = vmatprep.mubr.f32.mxu0 0.0
  %186 = vmatmul.mubr.f32.gmra.mrb[0].mxu0 %v86
  %v187 = vpop.f32.mrb[0].mxu0
  %v188 = vadd.f32 0.0, %v187
  %v189 = vpop.f32.mrb[0].mxu0
  %v190 = vadd.f32 0.0, %v189
  %191 = vmatprep.mubr.f32.mxu0 0.0
  %192 = vmatmul.mubr.f32.gmra.mrb[0].mxu0 %v89
  %v193 = vpop.f32.mrb[0].mxu0
  %v194 = vadd.f32 0.0, %v193
  %v195 = vpop.f32.mrb[0].mxu0
  %v196 = vadd.f32 0.0, %v195
  %197 = vmatprep.mubr.f32.mxu0 0.0
  %198 = vmatmul.mubr.f32.gmra.mrb[0].mxu0 %v92
  %v199 = vpop.f32.mrb[0].mxu0
  %v200 = vadd.f32 0.0, %v199
  %v201 = vpop.f32.mrb[0].mxu0
  %v202 = vadd.f32 0.0, %v201
  %203 = vmatprep.mubr.f32.mxu0 0.0
  %204 = vmatmul.mubr.f32.gmra.mrb[0].mxu0 %v95
  %v205 = vpop.f32.mrb[0].mxu0
  %v206 = vadd.f32 0.0, %v205
  %v207 = vpop.f32.mrb[0].mxu0
  %v208 = vadd.f32 0.0, %v207
  %209 = vdwg.mxu0
  %v210 = vxor.u32 %v164, 2147483648
  %v211 = vxor.u32 %v170, 2147483648
  %v212 = vxor.u32 %v176, 2147483648
  %v213 = vxor.u32 %v182, 2147483648
  %v214 = vxor.u32 %v188, 2147483648
  %v215 = vxor.u32 %v194, 2147483648
  %v216 = vxor.u32 %v200, 2147483648
  %v217 = vxor.u32 %v206, 2147483648
  %v218 = vmul.f32 %v210, 1.442695
  %v219 = vpow.pop %v218
  %v220 = vmul.f32 %v211, 1.442695
  %v221 = vpow.pop %v220
  %v222 = vmul.f32 %v212, 1.442695
  %v223 = vpow.pop %v222
  %v224 = vmul.f32 %v213, 1.442695
  %v225 = vpow.pop %v224
  %v226 = vmul.f32 %v214, 1.442695
  %v227 = vpow.pop %v226
  %v228 = vmul.f32 %v215, 1.442695
  %v229 = vpow.pop %v228
  %v230 = vmul.f32 %v216, 1.442695
  %v231 = vpow.pop %v230
  %v232 = vmul.f32 %v217, 1.442695
  %v233 = vpow.pop %v232
  %v234 = vadd.f32 %v219, 1.0
  %v235 = vadd.f32 %v221, 1.0
  %v236 = vadd.f32 %v223, 1.0
  %v237 = vadd.f32 %v225, 1.0
  %v238 = vadd.f32 %v227, 1.0
  %v239 = vadd.f32 %v229, 1.0
  %v240 = vadd.f32 %v231, 1.0
  %v241 = vadd.f32 %v233, 1.0
  %v242 = vrcp.pop %v234
  %v243 = vmul.f32 1.0, %v242
  %v244 = vrcp.pop %v235
  %v245 = vmul.f32 1.0, %v244
  %v246 = vrcp.pop %v236
  %v247 = vmul.f32 1.0, %v246
  %v248 = vrcp.pop %v237
  %v249 = vmul.f32 1.0, %v248
  %v250 = vrcp.pop %v238
  %v251 = vmul.f32 1.0, %v250
  %v252 = vrcp.pop %v239
  %v253 = vmul.f32 1.0, %v252
  %v254 = vrcp.pop %v240
  %v255 = vmul.f32 1.0, %v254
  %v256 = vrcp.pop %v241
  %v257 = vmul.f32 1.0, %v256
  %v258 = vmul.f32 %v164, %v243
  %v259 = vmul.f32 %v170, %v245
  %v260 = vmul.f32 %v176, %v247
  %v261 = vmul.f32 %v182, %v249
  %v262 = vmul.f32 %v188, %v251
  %v263 = vmul.f32 %v194, %v253
  %v264 = vmul.f32 %v200, %v255
  %v265 = vmul.f32 %v206, %v257
  %v266 = vld [vmem:[%s2] sm:$0xff]
  %v267 = vld [vmem:[%s2 + $0x8] sm:$0xff]
  %v268 = vld [vmem:[%s2 + $0x10] sm:$0xff]
  %v269 = vld [vmem:[%s2 + $0x18] sm:$0xff]
  %278 = vrot.lane.b32.xlu0 %v258, 32
  %v279 = vpop.permute.xlu0 %278
  %280 = vrot.lane.b32.xlu0 %v259, 32
  %v281 = vpop.permute.xlu0 %280
  %282 = vrot.lane.b32.xlu0 %v260, 32
  %v283 = vpop.permute.xlu0 %282
  %284 = vrot.lane.b32.xlu0 %v261, 32
  %v285 = vpop.permute.xlu0 %284
  %286 = vrot.lane.b32.xlu0 %v262, 32
  %v287 = vpop.permute.xlu0 %286
  %288 = vrot.lane.b32.xlu0 %v263, 32
  %v289 = vpop.permute.xlu0 %288
  %290 = vrot.lane.b32.xlu0 %v264, 32
  %v291 = vpop.permute.xlu0 %290
  %292 = vrot.lane.b32.xlu0 %v265, 32
  %v293 = vpop.permute.xlu0 %292
  %vm294 = vcmask 261120
  %v295 = vsel %vm294, %v279, 0
  %v297 = vsel %vm294, %v281, 0
  %v299 = vsel %vm294, %v283, 0
  %v301 = vsel %vm294, %v285, 0
  %v303 = vsel %vm294, %v287, 0
  %v305 = vsel %vm294, %v289, 0
  %v307 = vsel %vm294, %v291, 0
  %v309 = vsel %vm294, %v293, 0
  %311 = vmatprep.subr.mxu0 0.0
  %312 = vmatpush1.msra.mxu0 %v266
  %313 = vmatprep.subr.mxu0 0.0
  %314 = vmatpush1.msra.mxu0 %v267
  %315 = vmatprep.subr.mxu0 0.0
  %316 = vmatpush1.msra.mxu0 %v268
  %317 = vmatprep.subr.mxu0 0.0
  %318 = vmatpush1.msra.mxu0 %v269
  %319 = vmatprep.subr.mxu0 0.0
  %320 = vmatpush1.msra.mxu0 0.0
  %321 = vmatprep.subr.mxu0 0.0
  %322 = vmatpush1.msra.mxu0 0.0
  %323 = vmatprep.subr.mxu0 0.0
  %324 = vmatpush1.msra.mxu0 0.0
  %325 = vmatprep.subr.mxu0 0.0
  %326 = vmatpush1.msra.mxu0 0.0
  %327 = vmatprep.subr.mxu0 0.0
  %328 = vmatpush1.msra.mxu0 0.0
  %329 = vmatprep.subr.mxu0 0.0
  %330 = vmatpush1.msra.mxu0 0.0
  %331 = vmatprep.subr.mxu0 0.0
  %332 = vmatpush1.msra.mxu0 0.0
  %333 = vmatprep.subr.mxu0 0.0
  %334 = vmatpush1.msra.mxu0 0.0
  %335 = vmatprep.subr.mxu0 0.0
  %336 = vmatpush1.msra.mxu0 0.0
  %337 = vmatprep.subr.mxu0 0.0
  %338 = vmatpush1.msra.mxu0 0.0
  %339 = vmatprep.subr.mxu0 0.0
  %340 = vmatpush1.msra.mxu0 0.0
  %341 = vmatprep.subr.mxu0 0.0
  %342 = vmatpush1.msra.mxu0 0.0
  %343 = vmatprep.subr.mxu0 0.0
  %344 = vmatpush1.msra.mxu0 0.0
  %345 = vmatprep.subr.mxu0 0.0
  %346 = vmatpush1.msra.mxu0 0.0
  %347 = vmatprep.subr.mxu0 0.0
  %348 = vmatpush1.msra.mxu0 0.0
  %349 = vmatprep.subr.mxu0 0.0
  %350 = vmatpush1.msra.mxu0 0.0
  %351 = vmatprep.subr.mxu0 0.0
  %352 = vmatpush1.msra.mxu0 0.0
  %353 = vmatprep.subr.mxu0 0.0
  %354 = vmatpush1.msra.mxu0 0.0
  %355 = vmatprep.subr.mxu0 0.0
  %356 = vmatpush1.msra.mxu0 0.0
  %357 = vmatprep.subr.mxu0 0.0
  %358 = vmatpush1.msra.mxu0 0.0
  %359 = vmatprep.subr.mxu0 0.0
  %360 = vmatpush1.msra.mxu0 0.0
  %361 = vmatprep.subr.mxu0 0.0
  %362 = vmatpush1.msra.mxu0 0.0
  %363 = vmatprep.subr.mxu0 0.0
  %364 = vmatpush1.msra.mxu0 0.0
  %365 = vmatprep.subr.mxu0 0.0
  %366 = vmatpush1.msra.mxu0 0.0
  %367 = vmatprep.subr.mxu0 0.0
  %368 = vmatpush1.msra.mxu0 0.0
  %369 = vmatprep.subr.mxu0 0.0
  %370 = vmatpush1.msra.mxu0 0.0
  %371 = vmatprep.subr.mxu0 0.0
  %372 = vmatpush1.msra.mxu0 0.0
  %373 = vmatprep.subr.mxu0 0.0
  %374 = vmatpush1.msra.mxu0 0.0
  %375 = vmatprep.mubr.f32.mxu0 0.0
  %376 = vmatmul.mubr.f32.gmra.mrb[0].mxu0 %v295
  %v377 = vpop.f32.mrb[0].mxu0
  %v378 = vadd.f32 0.0, %v377
  %v379 = vpop.f32.mrb[0].mxu0
  %380 = vmatprep.mubr.f32.mxu0 0.0
  %381 = vmatmul.mubr.f32.gmra.mrb[0].mxu0 %v297
  %v382 = vpop.f32.mrb[0].mxu0
  %v383 = vadd.f32 0.0, %v382
  %v384 = vpop.f32.mrb[0].mxu0
  %385 = vmatprep.mubr.f32.mxu0 0.0
  %386 = vmatmul.mubr.f32.gmra.mrb[0].mxu0 %v299
  %v387 = vpop.f32.mrb[0].mxu0
  %v388 = vadd.f32 0.0, %v387
  %v389 = vpop.f32.mrb[0].mxu0
  %390 = vmatprep.mubr.f32.mxu0 0.0
  %391 = vmatmul.mubr.f32.gmra.mrb[0].mxu0 %v301
  %v392 = vpop.f32.mrb[0].mxu0
  %v393 = vadd.f32 0.0, %v392
  %v394 = vpop.f32.mrb[0].mxu0
  %395 = vmatprep.mubr.f32.mxu0 0.0
  %396 = vmatmul.mubr.f32.gmra.mrb[0].mxu0 %v303
  %v397 = vpop.f32.mrb[0].mxu0
  %v398 = vadd.f32 0.0, %v397
  %v399 = vpop.f32.mrb[0].mxu0
  %400 = vmatprep.mubr.f32.mxu0 0.0
  %401 = vmatmul.mubr.f32.gmra.mrb[0].mxu0 %v305
  %v402 = vpop.f32.mrb[0].mxu0
  %v403 = vadd.f32 0.0, %v402
  %v404 = vpop.f32.mrb[0].mxu0
  %405 = vmatprep.mubr.f32.mxu0 0.0
  %406 = vmatmul.mubr.f32.gmra.mrb[0].mxu0 %v307
  %v407 = vpop.f32.mrb[0].mxu0
  %v408 = vadd.f32 0.0, %v407
  %v409 = vpop.f32.mrb[0].mxu0
  %410 = vmatprep.mubr.f32.mxu0 0.0
  %411 = vmatmul.mubr.f32.gmra.mrb[0].mxu0 %v309
  %v412 = vpop.f32.mrb[0].mxu0
  %v413 = vadd.f32 0.0, %v412
  %v414 = vpop.f32.mrb[0].mxu0
  %415 = vdwg.mxu0
  %v416 = vadd.f32 %v166, %v378
  %v417 = vadd.f32 %v172, %v383
  %v418 = vadd.f32 %v178, %v388
  %v419 = vadd.f32 %v184, %v393
  %v420 = vadd.f32 %v190, %v398
  %v421 = vadd.f32 %v196, %v403
  %v422 = vadd.f32 %v202, %v408
  %v423 = vadd.f32 %v208, %v413
  %vm424 = vcmp.ge.f32.partialorder %v416, 0.0
  %vm425 = vcmp.ge.f32.partialorder %v417, 0.0
  %vm426 = vcmp.ge.f32.partialorder %v418, 0.0
  %vm427 = vcmp.ge.f32.partialorder %v419, 0.0
  %vm428 = vcmp.ge.f32.partialorder %v420, 0.0
  %vm429 = vcmp.ge.f32.partialorder %v421, 0.0
  %vm430 = vcmp.ge.f32.partialorder %v422, 0.0
  %vm431 = vcmp.ge.f32.partialorder %v423, 0.0
  %v432 = vmul.f32 %v416, 0.01
  %v433 = vmul.f32 %v417, 0.01
  %v434 = vmul.f32 %v418, 0.01
  %v435 = vmul.f32 %v419, 0.01
  %v436 = vmul.f32 %v420, 0.01
  %v437 = vmul.f32 %v421, 0.01
  %v438 = vmul.f32 %v422, 0.01
  %v439 = vmul.f32 %v423, 0.01
  %v440 = vsel %vm424, %v416, %v432
  %v441 = vsel %vm425, %v417, %v433
  %v442 = vsel %vm426, %v418, %v434
  %v443 = vsel %vm427, %v419, %v435
  %v444 = vsel %vm428, %v420, %v436
  %v445 = vsel %vm429, %v421, %v437
  %v446 = vsel %vm430, %v422, %v438
  %v447 = vsel %vm431, %v423, %v439
  %v448 = vld [vmem:[%s3] sm:$0xff]
  %v449 = vld [vmem:[%s3 + $0x8] sm:$0xff]
  %v450 = vld [vmem:[%s3 + $0x10] sm:$0xff]
  %v451 = vld [vmem:[%s3 + $0x18] sm:$0xff]
  %v452 = vld [vmem:[%s4] sm:$0x1]
  %v454 = vlaneseq
  %v455 = vshrl.u32 %v454, 7
  %v456 = vsub.s32 0, %v455
  %v457 = vrot.slane %v452, %v456
  %v460 = vsel %vm294, %v440, 0
  %v463 = vsel %vm294, %v441, 0
  %v466 = vsel %vm294, %v442, 0
  %v469 = vsel %vm294, %v443, 0
  %v472 = vsel %vm294, %v444, 0
  %v475 = vsel %vm294, %v445, 0
  %v478 = vsel %vm294, %v446, 0
  %v481 = vsel %vm294, %v447, 0
  %483 = vmatprep.subr.mxu0 0.0
  %484 = vmatpush1.msra.mxu0 %v448
  %485 = vmatprep.subr.mxu0 0.0
  %486 = vmatpush1.msra.mxu0 %v449
  %487 = vmatprep.subr.mxu0 0.0
  %488 = vmatpush1.msra.mxu0 %v450
  %489 = vmatprep.subr.mxu0 0.0
  %490 = vmatpush1.msra.mxu0 %v451
  %491 = vmatprep.subr.mxu0 0.0
  %492 = vmatpush1.msra.mxu0 0.0
  %493 = vmatprep.subr.mxu0 0.0
  %494 = vmatpush1.msra.mxu0 0.0
  %495 = vmatprep.subr.mxu0 0.0
  %496 = vmatpush1.msra.mxu0 0.0
  %497 = vmatprep.subr.mxu0 0.0
  %498 = vmatpush1.msra.mxu0 0.0
  %499 = vmatprep.subr.mxu0 0.0
  %500 = vmatpush1.msra.mxu0 0.0
  %501 = vmatprep.subr.mxu0 0.0
  %502 = vmatpush1.msra.mxu0 0.0
  %503 = vmatprep.subr.mxu0 0.0
  %504 = vmatpush1.msra.mxu0 0.0
  %505 = vmatprep.subr.mxu0 0.0
  %506 = vmatpush1.msra.mxu0 0.0
  %507 = vmatprep.subr.mxu0 0.0
  %508 = vmatpush1.msra.mxu0 0.0
  %509 = vmatprep.subr.mxu0 0.0
  %510 = vmatpush1.msra.mxu0 0.0
  %511 = vmatprep.subr.mxu0 0.0
  %512 = vmatpush1.msra.mxu0 0.0
  %513 = vmatprep.subr.mxu0 0.0
  %514 = vmatpush1.msra.mxu0 0.0
  %515 = vmatprep.subr.mxu0 0.0
  %516 = vmatpush1.msra.mxu0 0.0
  %517 = vmatprep.subr.mxu0 0.0
  %518 = vmatpush1.msra.mxu0 0.0
  %519 = vmatprep.subr.mxu0 0.0
  %520 = vmatpush1.msra.mxu0 0.0
  %521 = vmatprep.subr.mxu0 0.0
  %522 = vmatpush1.msra.mxu0 0.0
  %523 = vmatprep.subr.mxu0 0.0
  %524 = vmatpush1.msra.mxu0 0.0
  %525 = vmatprep.subr.mxu0 0.0
  %526 = vmatpush1.msra.mxu0 0.0
  %527 = vmatprep.subr.mxu0 0.0
  %528 = vmatpush1.msra.mxu0 0.0
  %529 = vmatprep.subr.mxu0 0.0
  %530 = vmatpush1.msra.mxu0 0.0
  %531 = vmatprep.subr.mxu0 0.0
  %532 = vmatpush1.msra.mxu0 0.0
  %533 = vmatprep.subr.mxu0 0.0
  %534 = vmatpush1.msra.mxu0 0.0
  %535 = vmatprep.subr.mxu0 0.0
  %536 = vmatpush1.msra.mxu0 0.0
  %537 = vmatprep.subr.mxu0 0.0
  %538 = vmatpush1.msra.mxu0 0.0
  %539 = vmatprep.subr.mxu0 0.0
  %540 = vmatpush1.msra.mxu0 0.0
  %541 = vmatprep.subr.mxu0 0.0
  %542 = vmatpush1.msra.mxu0 0.0
  %543 = vmatprep.subr.mxu0 0.0
  %544 = vmatpush1.msra.mxu0 0.0
  %545 = vmatprep.subr.mxu0 0.0
  %546 = vmatpush1.msra.mxu0 0.0
  %547 = vmatprep.mubr.f32.mxu0 0.0
  %548 = vmatmul.mubr.f32.gmra.mrb[0].mxu0 %v460
  %v549 = vpop.f32.mrb[0].mxu0
  %v550 = vadd.f32 %v457, %v549
  %v551 = vpop.f32.mrb[0].mxu0
  %552 = vmatprep.mubr.f32.mxu0 0.0
  %553 = vmatmul.mubr.f32.gmra.mrb[0].mxu0 %v463
  %v554 = vpop.f32.mrb[0].mxu0
  %v555 = vadd.f32 %v457, %v554
  %v556 = vpop.f32.mrb[0].mxu0
  %557 = vmatprep.mubr.f32.mxu0 0.0
  %558 = vmatmul.mubr.f32.gmra.mrb[0].mxu0 %v466
  %v559 = vpop.f32.mrb[0].mxu0
  %v560 = vadd.f32 %v457, %v559
  %v561 = vpop.f32.mrb[0].mxu0
  %562 = vmatprep.mubr.f32.mxu0 0.0
  %563 = vmatmul.mubr.f32.gmra.mrb[0].mxu0 %v469
  %v564 = vpop.f32.mrb[0].mxu0
  %v565 = vadd.f32 %v457, %v564
  %v566 = vpop.f32.mrb[0].mxu0
  %567 = vmatprep.mubr.f32.mxu0 0.0
  %568 = vmatmul.mubr.f32.gmra.mrb[0].mxu0 %v472
  %v569 = vpop.f32.mrb[0].mxu0
  %v570 = vadd.f32 %v457, %v569
  %v571 = vpop.f32.mrb[0].mxu0
  %572 = vmatprep.mubr.f32.mxu0 0.0
  %573 = vmatmul.mubr.f32.gmra.mrb[0].mxu0 %v475
  %v574 = vpop.f32.mrb[0].mxu0
  %v575 = vadd.f32 %v457, %v574
  %v576 = vpop.f32.mrb[0].mxu0
  %577 = vmatprep.mubr.f32.mxu0 0.0
  %578 = vmatmul.mubr.f32.gmra.mrb[0].mxu0 %v478
  %v579 = vpop.f32.mrb[0].mxu0
  %v580 = vadd.f32 %v457, %v579
  %v581 = vpop.f32.mrb[0].mxu0
  %582 = vmatprep.mubr.f32.mxu0 0.0
  %583 = vmatmul.mubr.f32.gmra.mrb[0].mxu0 %v481
  %v584 = vpop.f32.mrb[0].mxu0
  %v585 = vadd.f32 %v457, %v584
  %v586 = vpop.f32.mrb[0].mxu0
  %587 = vdwg.mxu0
  %596 = vrot.lane.b32.xlu0 %v550, 32
  %v597 = vpop.permute.xlu0 %596
  %598 = vrot.lane.b32.xlu0 %v555, 32
  %v599 = vpop.permute.xlu0 %598
  %600 = vrot.lane.b32.xlu0 %v560, 32
  %v601 = vpop.permute.xlu0 %600
  %602 = vrot.lane.b32.xlu0 %v565, 32
  %v603 = vpop.permute.xlu0 %602
  %604 = vrot.lane.b32.xlu0 %v570, 32
  %v605 = vpop.permute.xlu0 %604
  %606 = vrot.lane.b32.xlu0 %v575, 32
  %v607 = vpop.permute.xlu0 %606
  %608 = vrot.lane.b32.xlu0 %v580, 32
  %v609 = vpop.permute.xlu0 %608
  %610 = vrot.lane.b32.xlu0 %v585, 32
  %v611 = vpop.permute.xlu0 %610
  %v620 = vmul.f32 %v164, %v597
  %v621 = vmul.f32 %v170, %v599
  %v622 = vmul.f32 %v176, %v601
  %v623 = vmul.f32 %v182, %v603
  %v624 = vmul.f32 %v188, %v605
  %v625 = vmul.f32 %v194, %v607
  %v626 = vmul.f32 %v200, %v609
  %v627 = vmul.f32 %v206, %v611
  %636 = vrot.lane.b32.xlu0 %v620, 96
  %v637 = vpop.permute.xlu0 %636
  %638 = vrot.lane.b32.xlu0 %v621, 96
  %v639 = vpop.permute.xlu0 %638
  %640 = vrot.lane.b32.xlu0 %v622, 96
  %v641 = vpop.permute.xlu0 %640
  %642 = vrot.lane.b32.xlu0 %v623, 96
  %v643 = vpop.permute.xlu0 %642
  %644 = vrot.lane.b32.xlu0 %v624, 96
  %v645 = vpop.permute.xlu0 %644
  %646 = vrot.lane.b32.xlu0 %v625, 96
  %v647 = vpop.permute.xlu0 %646
  %648 = vrot.lane.b32.xlu0 %v626, 96
  %v649 = vpop.permute.xlu0 %648
  %650 = vrot.lane.b32.xlu0 %v627, 96
  %v651 = vpop.permute.xlu0 %650
  %v660 = vmul.f32 %v164, %v637
  %v661 = vmul.f32 %v170, %v639
  %v662 = vmul.f32 %v176, %v641
  %v663 = vmul.f32 %v182, %v643
  %v664 = vmul.f32 %v188, %v645
  %v665 = vmul.f32 %v194, %v647
  %v666 = vmul.f32 %v200, %v649
  %v667 = vmul.f32 %v206, %v651
  %v668 = vmul.f32 %v660, 0.5
  %v669 = vmul.f32 %v661, 0.5
  %v670 = vmul.f32 %v662, 0.5
  %v671 = vmul.f32 %v663, 0.5
  %v672 = vmul.f32 %v664, 0.5
  %v673 = vmul.f32 %v665, 0.5
  %v674 = vmul.f32 %v666, 0.5
  %v675 = vmul.f32 %v667, 0.5
  %v676 = vld [vmem:[%s5] sm:$0xff]
  %v677 = vld [vmem:[%s5 + $0x8] sm:$0xff]
  %v678 = vld [vmem:[%s5 + $0x10] sm:$0xff]
  %v679 = vld [vmem:[%s5 + $0x18] sm:$0xff]
  %688 = vrot.lane.b32.xlu0 %v166, 96
  %v689 = vpop.permute.xlu0 %688
  %690 = vrot.lane.b32.xlu0 %v172, 96
  %v691 = vpop.permute.xlu0 %690
  %692 = vrot.lane.b32.xlu0 %v178, 96
  %v693 = vpop.permute.xlu0 %692
  %694 = vrot.lane.b32.xlu0 %v184, 96
  %v695 = vpop.permute.xlu0 %694
  %696 = vrot.lane.b32.xlu0 %v190, 96
  %v697 = vpop.permute.xlu0 %696
  %698 = vrot.lane.b32.xlu0 %v196, 96
  %v699 = vpop.permute.xlu0 %698
  %700 = vrot.lane.b32.xlu0 %v202, 96
  %v701 = vpop.permute.xlu0 %700
  %702 = vrot.lane.b32.xlu0 %v208, 96
  %v703 = vpop.permute.xlu0 %702
  %v712 = vsel %vm294, %v550, 0
  %v714 = vsel %vm294, %v555, 0
  %v716 = vsel %vm294, %v560, 0
  %v718 = vsel %vm294, %v565, 0
  %v720 = vsel %vm294, %v570, 0
  %v722 = vsel %vm294, %v575, 0
  %v724 = vsel %vm294, %v580, 0
  %v726 = vsel %vm294, %v585, 0
  %728 = vmatprep.subr.mxu0 0.0
  %729 = vmatpush1.msra.mxu0 %v676
  %730 = vmatprep.subr.mxu0 0.0
  %731 = vmatpush1.msra.mxu0 %v677
  %732 = vmatprep.subr.mxu0 0.0
  %733 = vmatpush1.msra.mxu0 %v678
  %734 = vmatprep.subr.mxu0 0.0
  %735 = vmatpush1.msra.mxu0 %v679
  %736 = vmatprep.subr.mxu0 0.0
  %737 = vmatpush1.msra.mxu0 0.0
  %738 = vmatprep.subr.mxu0 0.0
  %739 = vmatpush1.msra.mxu0 0.0
  %740 = vmatprep.subr.mxu0 0.0
  %741 = vmatpush1.msra.mxu0 0.0
  %742 = vmatprep.subr.mxu0 0.0
  %743 = vmatpush1.msra.mxu0 0.0
  %744 = vmatprep.subr.mxu0 0.0
  %745 = vmatpush1.msra.mxu0 0.0
  %746 = vmatprep.subr.mxu0 0.0
  %747 = vmatpush1.msra.mxu0 0.0
  %748 = vmatprep.subr.mxu0 0.0
  %749 = vmatpush1.msra.mxu0 0.0
  %750 = vmatprep.subr.mxu0 0.0
  %751 = vmatpush1.msra.mxu0 0.0
  %752 = vmatprep.subr.mxu0 0.0
  %753 = vmatpush1.msra.mxu0 0.0
  %754 = vmatprep.subr.mxu0 0.0
  %755 = vmatpush1.msra.mxu0 0.0
  %756 = vmatprep.subr.mxu0 0.0
  %757 = vmatpush1.msra.mxu0 0.0
  %758 = vmatprep.subr.mxu0 0.0
  %759 = vmatpush1.msra.mxu0 0.0
  %760 = vmatprep.subr.mxu0 0.0
  %761 = vmatpush1.msra.mxu0 0.0
  %762 = vmatprep.subr.mxu0 0.0
  %763 = vmatpush1.msra.mxu0 0.0
  %764 = vmatprep.subr.mxu0 0.0
  %765 = vmatpush1.msra.mxu0 0.0
  %766 = vmatprep.subr.mxu0 0.0
  %767 = vmatpush1.msra.mxu0 0.0
  %768 = vmatprep.subr.mxu0 0.0
  %769 = vmatpush1.msra.mxu0 0.0
  %770 = vmatprep.subr.mxu0 0.0
  %771 = vmatpush1.msra.mxu0 0.0
  %772 = vmatprep.subr.mxu0 0.0
  %773 = vmatpush1.msra.mxu0 0.0
  %774 = vmatprep.subr.mxu0 0.0
  %775 = vmatpush1.msra.mxu0 0.0
  %776 = vmatprep.subr.mxu0 0.0
  %777 = vmatpush1.msra.mxu0 0.0
  %778 = vmatprep.subr.mxu0 0.0
  %779 = vmatpush1.msra.mxu0 0.0
  %780 = vmatprep.subr.mxu0 0.0
  %781 = vmatpush1.msra.mxu0 0.0
  %782 = vmatprep.subr.mxu0 0.0
  %783 = vmatpush1.msra.mxu0 0.0
  %784 = vmatprep.subr.mxu0 0.0
  %785 = vmatpush1.msra.mxu0 0.0
  %786 = vmatprep.subr.mxu0 0.0
  %787 = vmatpush1.msra.mxu0 0.0
  %788 = vmatprep.subr.mxu0 0.0
  %789 = vmatpush1.msra.mxu0 0.0
  %790 = vmatprep.subr.mxu0 0.0
  %791 = vmatpush1.msra.mxu0 0.0
  %792 = vmatprep.mubr.f32.mxu0 0.0
  %793 = vmatmul.mubr.f32.gmra.mrb[0].mxu0 %v712
  %v794 = vpop.f32.mrb[0].mxu0
  %v795 = vadd.f32 %v689, %v794
  %v796 = vpop.f32.mrb[0].mxu0
  %797 = vmatprep.mubr.f32.mxu0 0.0
  %798 = vmatmul.mubr.f32.gmra.mrb[0].mxu0 %v714
  %v799 = vpop.f32.mrb[0].mxu0
  %v800 = vadd.f32 %v691, %v799
  %v801 = vpop.f32.mrb[0].mxu0
  %802 = vmatprep.mubr.f32.mxu0 0.0
  %803 = vmatmul.mubr.f32.gmra.mrb[0].mxu0 %v716
  %v804 = vpop.f32.mrb[0].mxu0
  %v805 = vadd.f32 %v693, %v804
  %v806 = vpop.f32.mrb[0].mxu0
  %807 = vmatprep.mubr.f32.mxu0 0.0
  %808 = vmatmul.mubr.f32.gmra.mrb[0].mxu0 %v718
  %v809 = vpop.f32.mrb[0].mxu0
  %v810 = vadd.f32 %v695, %v809
  %v811 = vpop.f32.mrb[0].mxu0
  %812 = vmatprep.mubr.f32.mxu0 0.0
  %813 = vmatmul.mubr.f32.gmra.mrb[0].mxu0 %v720
  %v814 = vpop.f32.mrb[0].mxu0
  %v815 = vadd.f32 %v697, %v814
  %v816 = vpop.f32.mrb[0].mxu0
  %817 = vmatprep.mubr.f32.mxu0 0.0
  %818 = vmatmul.mubr.f32.gmra.mrb[0].mxu0 %v722
  %v819 = vpop.f32.mrb[0].mxu0
  %v820 = vadd.f32 %v699, %v819
  %v821 = vpop.f32.mrb[0].mxu0
  %822 = vmatprep.mubr.f32.mxu0 0.0
  %823 = vmatmul.mubr.f32.gmra.mrb[0].mxu0 %v724
  %v824 = vpop.f32.mrb[0].mxu0
  %v825 = vadd.f32 %v701, %v824
  %v826 = vpop.f32.mrb[0].mxu0
  %827 = vmatprep.mubr.f32.mxu0 0.0
  %828 = vmatmul.mubr.f32.gmra.mrb[0].mxu0 %v726
  %v829 = vpop.f32.mrb[0].mxu0
  %v830 = vadd.f32 %v703, %v829
  %v831 = vpop.f32.mrb[0].mxu0
  %832 = vdwg.mxu0
  %v833 = vxor.u32 %v795, 2147483648
  %v834 = vxor.u32 %v800, 2147483648
  %v835 = vxor.u32 %v805, 2147483648
  %v836 = vxor.u32 %v810, 2147483648
  %v837 = vxor.u32 %v815, 2147483648
  %v838 = vxor.u32 %v820, 2147483648
  %v839 = vxor.u32 %v825, 2147483648
  %v840 = vxor.u32 %v830, 2147483648
  %v841 = vmul.f32 %v833, 1.442695
  %v842 = vpow.pop %v841
  %v843 = vmul.f32 %v834, 1.442695
  %v844 = vpow.pop %v843
  %v845 = vmul.f32 %v835, 1.442695
  %v846 = vpow.pop %v845
  %v847 = vmul.f32 %v836, 1.442695
  %v848 = vpow.pop %v847
  %v849 = vmul.f32 %v837, 1.442695
  %v850 = vpow.pop %v849
  %v851 = vmul.f32 %v838, 1.442695
  %v852 = vpow.pop %v851
  %v853 = vmul.f32 %v839, 1.442695
  %v854 = vpow.pop %v853
  %v855 = vmul.f32 %v840, 1.442695
  %v856 = vpow.pop %v855
  %v857 = vadd.f32 %v842, 1.0
  %v858 = vadd.f32 %v844, 1.0
  %v859 = vadd.f32 %v846, 1.0
  %v860 = vadd.f32 %v848, 1.0
  %v861 = vadd.f32 %v850, 1.0
  %v862 = vadd.f32 %v852, 1.0
  %v863 = vadd.f32 %v854, 1.0
  %v864 = vadd.f32 %v856, 1.0
  %v865 = vrcp.pop %v857
  %v866 = vmul.f32 1.0, %v865
  %v867 = vrcp.pop %v858
  %v868 = vmul.f32 1.0, %v867
  %v869 = vrcp.pop %v859
  %v870 = vmul.f32 1.0, %v869
  %v871 = vrcp.pop %v860
  %v872 = vmul.f32 1.0, %v871
  %v873 = vrcp.pop %v861
  %v874 = vmul.f32 1.0, %v873
  %v875 = vrcp.pop %v862
  %v876 = vmul.f32 1.0, %v875
  %v877 = vrcp.pop %v863
  %v878 = vmul.f32 1.0, %v877
  %v879 = vrcp.pop %v864
  %v880 = vmul.f32 1.0, %v879
  %v881 = vmul.f32 %v795, %v866
  %v882 = vmul.f32 %v800, %v868
  %v883 = vmul.f32 %v805, %v870
  %v884 = vmul.f32 %v810, %v872
  %v885 = vmul.f32 %v815, %v874
  %v886 = vmul.f32 %v820, %v876
  %v887 = vmul.f32 %v825, %v878
  %v888 = vmul.f32 %v830, %v880
  %v889 = vld [vmem:[%s6] sm:$0xff]
  %v890 = vld [vmem:[%s6 + $0x8] sm:$0xff]
  %v891 = vld [vmem:[%s6 + $0x10] sm:$0xff]
  %v892 = vld [vmem:[%s6 + $0x18] sm:$0xff]
  %v893 = vld [vmem:[%s7] sm:$0x1]
  %v895 = vlaneseq
  %v896 = vshrl.u32 %v895, 7
  %v897 = vsub.s32 0, %v896
  %v898 = vrot.slane %v893, %v897
  %v901 = vsel %vm294, %v881, 0
  %v904 = vsel %vm294, %v882, 0
  %v907 = vsel %vm294, %v883, 0
  %v910 = vsel %vm294, %v884, 0
  %v913 = vsel %vm294, %v885, 0
  %v916 = vsel %vm294, %v886, 0
  %v919 = vsel %vm294, %v887, 0
  %v922 = vsel %vm294, %v888, 0
  %924 = vmatprep.subr.mxu0 0.0
  %925 = vmatpush1.msra.mxu0 %v889
  %926 = vmatprep.subr.mxu0 0.0
  %927 = vmatpush1.msra.mxu0 %v890
  %928 = vmatprep.subr.mxu0 0.0
  %929 = vmatpush1.msra.mxu0 %v891
  %930 = vmatprep.subr.mxu0 0.0
  %931 = vmatpush1.msra.mxu0 %v892
  %932 = vmatprep.subr.mxu0 0.0
  %933 = vmatpush1.msra.mxu0 0.0
  %934 = vmatprep.subr.mxu0 0.0
  %935 = vmatpush1.msra.mxu0 0.0
  %936 = vmatprep.subr.mxu0 0.0
  %937 = vmatpush1.msra.mxu0 0.0
  %938 = vmatprep.subr.mxu0 0.0
  %939 = vmatpush1.msra.mxu0 0.0
  %940 = vmatprep.subr.mxu0 0.0
  %941 = vmatpush1.msra.mxu0 0.0
  %942 = vmatprep.subr.mxu0 0.0
  %943 = vmatpush1.msra.mxu0 0.0
  %944 = vmatprep.subr.mxu0 0.0
  %945 = vmatpush1.msra.mxu0 0.0
  %946 = vmatprep.subr.mxu0 0.0
  %947 = vmatpush1.msra.mxu0 0.0
  %948 = vmatprep.subr.mxu0 0.0
  %949 = vmatpush1.msra.mxu0 0.0
  %950 = vmatprep.subr.mxu0 0.0
  %951 = vmatpush1.msra.mxu0 0.0
  %952 = vmatprep.subr.mxu0 0.0
  %953 = vmatpush1.msra.mxu0 0.0
  %954 = vmatprep.subr.mxu0 0.0
  %955 = vmatpush1.msra.mxu0 0.0
  %956 = vmatprep.subr.mxu0 0.0
  %957 = vmatpush1.msra.mxu0 0.0
  %958 = vmatprep.subr.mxu0 0.0
  %959 = vmatpush1.msra.mxu0 0.0
  %960 = vmatprep.subr.mxu0 0.0
  %961 = vmatpush1.msra.mxu0 0.0
  %962 = vmatprep.subr.mxu0 0.0
  %963 = vmatpush1.msra.mxu0 0.0
  %964 = vmatprep.subr.mxu0 0.0
  %965 = vmatpush1.msra.mxu0 0.0
  %966 = vmatprep.subr.mxu0 0.0
  %967 = vmatpush1.msra.mxu0 0.0
  %968 = vmatprep.subr.mxu0 0.0
  %969 = vmatpush1.msra.mxu0 0.0
  %970 = vmatprep.subr.mxu0 0.0
  %971 = vmatpush1.msra.mxu0 0.0
  %972 = vmatprep.subr.mxu0 0.0
  %973 = vmatpush1.msra.mxu0 0.0
  %974 = vmatprep.subr.mxu0 0.0
  %975 = vmatpush1.msra.mxu0 0.0
  %976 = vmatprep.subr.mxu0 0.0
  %977 = vmatpush1.msra.mxu0 0.0
  %978 = vmatprep.subr.mxu0 0.0
  %979 = vmatpush1.msra.mxu0 0.0
  %980 = vmatprep.subr.mxu0 0.0
  %981 = vmatpush1.msra.mxu0 0.0
  %982 = vmatprep.subr.mxu0 0.0
  %983 = vmatpush1.msra.mxu0 0.0
  %984 = vmatprep.subr.mxu0 0.0
  %985 = vmatpush1.msra.mxu0 0.0
  %986 = vmatprep.subr.mxu0 0.0
  %987 = vmatpush1.msra.mxu0 0.0
  %988 = vmatprep.mubr.f32.mxu0 0.0
  %989 = vmatmul.mubr.f32.gmra.mrb[0].mxu0 %v901
  %v990 = vpop.f32.mrb[0].mxu0
  %v991 = vadd.f32 %v898, %v990
  %v992 = vpop.f32.mrb[0].mxu0
  %993 = vmatprep.mubr.f32.mxu0 0.0
  %994 = vmatmul.mubr.f32.gmra.mrb[0].mxu0 %v904
  %v995 = vpop.f32.mrb[0].mxu0
  %v996 = vadd.f32 %v898, %v995
  %v997 = vpop.f32.mrb[0].mxu0
  %998 = vmatprep.mubr.f32.mxu0 0.0
  %999 = vmatmul.mubr.f32.gmra.mrb[0].mxu0 %v907
  %v1000 = vpop.f32.mrb[0].mxu0
  %v1001 = vadd.f32 %v898, %v1000
  %v1002 = vpop.f32.mrb[0].mxu0
  %1003 = vmatprep.mubr.f32.mxu0 0.0
  %1004 = vmatmul.mubr.f32.gmra.mrb[0].mxu0 %v910
  %v1005 = vpop.f32.mrb[0].mxu0
  %v1006 = vadd.f32 %v898, %v1005
  %v1007 = vpop.f32.mrb[0].mxu0
  %1008 = vmatprep.mubr.f32.mxu0 0.0
  %1009 = vmatmul.mubr.f32.gmra.mrb[0].mxu0 %v913
  %v1010 = vpop.f32.mrb[0].mxu0
  %v1011 = vadd.f32 %v898, %v1010
  %v1012 = vpop.f32.mrb[0].mxu0
  %1013 = vmatprep.mubr.f32.mxu0 0.0
  %1014 = vmatmul.mubr.f32.gmra.mrb[0].mxu0 %v916
  %v1015 = vpop.f32.mrb[0].mxu0
  %v1016 = vadd.f32 %v898, %v1015
  %v1017 = vpop.f32.mrb[0].mxu0
  %1018 = vmatprep.mubr.f32.mxu0 0.0
  %1019 = vmatmul.mubr.f32.gmra.mrb[0].mxu0 %v919
  %v1020 = vpop.f32.mrb[0].mxu0
  %v1021 = vadd.f32 %v898, %v1020
  %v1022 = vpop.f32.mrb[0].mxu0
  %1023 = vmatprep.mubr.f32.mxu0 0.0
  %1024 = vmatmul.mubr.f32.gmra.mrb[0].mxu0 %v922
  %v1025 = vpop.f32.mrb[0].mxu0
  %v1026 = vadd.f32 %v898, %v1025
  %v1027 = vpop.f32.mrb[0].mxu0
  %1028 = vdwg.mxu0
  %v1029 = vxor.u32 %v991, 2147483648
  %v1030 = vxor.u32 %v996, 2147483648
  %v1031 = vxor.u32 %v1001, 2147483648
  %v1032 = vxor.u32 %v1006, 2147483648
  %v1033 = vxor.u32 %v1011, 2147483648
  %v1034 = vxor.u32 %v1016, 2147483648
  %v1035 = vxor.u32 %v1021, 2147483648
  %v1036 = vxor.u32 %v1026, 2147483648
  %v1037 = vmul.f32 %v1029, 1.442695
  %v1038 = vpow.pop %v1037
  %v1039 = vmul.f32 %v1030, 1.442695
  %v1040 = vpow.pop %v1039
  %v1041 = vmul.f32 %v1031, 1.442695
  %v1042 = vpow.pop %v1041
  %v1043 = vmul.f32 %v1032, 1.442695
  %v1044 = vpow.pop %v1043
  %v1045 = vmul.f32 %v1033, 1.442695
  %v1046 = vpow.pop %v1045
  %v1047 = vmul.f32 %v1034, 1.442695
  %v1048 = vpow.pop %v1047
  %v1049 = vmul.f32 %v1035, 1.442695
  %v1050 = vpow.pop %v1049
  %v1051 = vmul.f32 %v1036, 1.442695
  %v1052 = vpow.pop %v1051
  %v1053 = vadd.f32 %v1038, 1.0
  %v1054 = vadd.f32 %v1040, 1.0
  %v1055 = vadd.f32 %v1042, 1.0
  %v1056 = vadd.f32 %v1044, 1.0
  %v1057 = vadd.f32 %v1046, 1.0
  %v1058 = vadd.f32 %v1048, 1.0
  %v1059 = vadd.f32 %v1050, 1.0
  %v1060 = vadd.f32 %v1052, 1.0
  %v1061 = vrcp.pop %v1053
  %v1062 = vmul.f32 1.0, %v1061
  %v1063 = vrcp.pop %v1054
  %v1064 = vmul.f32 1.0, %v1063
  %v1065 = vrcp.pop %v1055
  %v1066 = vmul.f32 1.0, %v1065
  %v1067 = vrcp.pop %v1056
  %v1068 = vmul.f32 1.0, %v1067
  %v1069 = vrcp.pop %v1057
  %v1070 = vmul.f32 1.0, %v1069
  %v1071 = vrcp.pop %v1058
  %v1072 = vmul.f32 1.0, %v1071
  %v1073 = vrcp.pop %v1059
  %v1074 = vmul.f32 1.0, %v1073
  %v1075 = vrcp.pop %v1060
  %v1076 = vmul.f32 1.0, %v1075
  %v1077 = vld [vmem:[%s10] sm:$0xff]
  %v1078 = vand.u32 2147483647, %v668
  %v1079 = vand.u32 2147483647, %v669
  %v1080 = vand.u32 2147483647, %v670
  %v1081 = vand.u32 2147483647, %v671
  %v1082 = vand.u32 2147483647, %v672
  %v1083 = vand.u32 2147483647, %v673
  %v1084 = vand.u32 2147483647, %v674
  %v1085 = vand.u32 2147483647, %v675
  %v1087 = vsel %vm294, %v1078, 0
  %v1090 = vsel %vm294, %v1079, 0
  %v1093 = vsel %vm294, %v1080, 0
  %v1096 = vsel %vm294, %v1081, 0
  %v1099 = vsel %vm294, %v1082, 0
  %v1102 = vsel %vm294, %v1083, 0
  %v1105 = vsel %vm294, %v1084, 0
  %v1108 = vsel %vm294, %v1085, 0
  %v1111 = vsel %vm294, %v1077, 0
  %1113 = vmatprep.subr.mxu0 0.0
  %1114 = vmatpush1.xpose.msra.mxu0 %v1111
  %1115 = vmatprep.subr.mxu0 0.0
  %1116 = vmatpush1.xpose.msra.mxu0 0.0
  %1117 = vmatprep.subr.mxu0 0.0
  %1118 = vmatpush1.xpose.msra.mxu0 0.0
  %1119 = vmatprep.subr.mxu0 0.0
  %1120 = vmatpush1.xpose.msra.mxu0 0.0
  %1121 = vmatprep.subr.mxu0 0.0
  %1122 = vmatpush1.xpose.msra.mxu0 0.0
  %1123 = vmatprep.subr.mxu0 0.0
  %1124 = vmatpush1.xpose.msra.mxu0 0.0
  %1125 = vmatprep.subr.mxu0 0.0
  %1126 = vmatpush1.xpose.msra.mxu0 0.0
  %1127 = vmatprep.subr.mxu0 0.0
  %1128 = vmatpush1.xpose.msra.mxu0 0.0
  %1129 = vmatprep.subr.mxu0 0.0
  %1130 = vmatpush1.xpose.msra.mxu0 0.0
  %1131 = vmatprep.subr.mxu0 0.0
  %1132 = vmatpush1.xpose.msra.mxu0 0.0
  %1133 = vmatprep.subr.mxu0 0.0
  %1134 = vmatpush1.xpose.msra.mxu0 0.0
  %1135 = vmatprep.subr.mxu0 0.0
  %1136 = vmatpush1.xpose.msra.mxu0 0.0
  %1137 = vmatprep.subr.mxu0 0.0
  %1138 = vmatpush1.xpose.msra.mxu0 0.0
  %1139 = vmatprep.subr.mxu0 0.0
  %1140 = vmatpush1.xpose.msra.mxu0 0.0
  %1141 = vmatprep.subr.mxu0 0.0
  %1142 = vmatpush1.xpose.msra.mxu0 0.0
  %1143 = vmatprep.subr.mxu0 0.0
  %1144 = vmatpush1.xpose.msra.mxu0 0.0
  %1145 = vmatprep.subr.mxu0 0.0
  %1146 = vmatpush1.xpose.msra.mxu0 0.0
  %1147 = vmatprep.subr.mxu0 0.0
  %1148 = vmatpush1.xpose.msra.mxu0 0.0
  %1149 = vmatprep.subr.mxu0 0.0
  %1150 = vmatpush1.xpose.msra.mxu0 0.0
  %1151 = vmatprep.subr.mxu0 0.0
  %1152 = vmatpush1.xpose.msra.mxu0 0.0
  %1153 = vmatprep.subr.mxu0 0.0
  %1154 = vmatpush1.xpose.msra.mxu0 0.0
  %1155 = vmatprep.subr.mxu0 0.0
  %1156 = vmatpush1.xpose.msra.mxu0 0.0
  %1157 = vmatprep.subr.mxu0 0.0
  %1158 = vmatpush1.xpose.msra.mxu0 0.0
  %1159 = vmatprep.subr.mxu0 0.0
  %1160 = vmatpush1.xpose.msra.mxu0 0.0
  %1161 = vmatprep.subr.mxu0 0.0
  %1162 = vmatpush1.xpose.msra.mxu0 0.0
  %1163 = vmatprep.subr.mxu0 0.0
  %1164 = vmatpush1.xpose.msra.mxu0 0.0
  %1165 = vmatprep.subr.mxu0 0.0
  %1166 = vmatpush1.xpose.msra.mxu0 0.0
  %1167 = vmatprep.subr.mxu0 0.0
  %1168 = vmatpush1.xpose.msra.mxu0 0.0
  %1169 = vmatprep.subr.mxu0 0.0
  %1170 = vmatpush1.xpose.msra.mxu0 0.0
  %1171 = vmatprep.subr.mxu0 0.0
  %1172 = vmatpush1.xpose.msra.mxu0 0.0
  %1173 = vmatprep.subr.mxu0 0.0
  %1174 = vmatpush1.xpose.msra.mxu0 0.0
  %1175 = vmatprep.subr.mxu0 0.0
  %1176 = vmatpush1.xpose.msra.mxu0 0.0
  %1177 = vmatprep.mubr.f32.mxu0 0.0
  %1178 = vmatmul.mubr.f32.gmra.mrb[0].mxu0 %v1087
  %v1179 = vpop.f32.mrb[0].mxu0
  %v1180 = vadd.f32 0.0, %v1179
  %v1181 = vpop.f32.mrb[0].mxu0
  %1182 = vmatprep.mubr.f32.mxu0 0.0
  %1183 = vmatmul.mubr.f32.gmra.mrb[0].mxu0 %v1090
  %v1184 = vpop.f32.mrb[0].mxu0
  %v1185 = vadd.f32 0.0, %v1184
  %v1186 = vpop.f32.mrb[0].mxu0
  %1187 = vmatprep.mubr.f32.mxu0 0.0
  %1188 = vmatmul.mubr.f32.gmra.mrb[0].mxu0 %v1093
  %v1189 = vpop.f32.mrb[0].mxu0
  %v1190 = vadd.f32 0.0, %v1189
  %v1191 = vpop.f32.mrb[0].mxu0
  %1192 = vmatprep.mubr.f32.mxu0 0.0
  %1193 = vmatmul.mubr.f32.gmra.mrb[0].mxu0 %v1096
  %v1194 = vpop.f32.mrb[0].mxu0
  %v1195 = vadd.f32 0.0, %v1194
  %v1196 = vpop.f32.mrb[0].mxu0
  %1197 = vmatprep.mubr.f32.mxu0 0.0
  %1198 = vmatmul.mubr.f32.gmra.mrb[0].mxu0 %v1099
  %v1199 = vpop.f32.mrb[0].mxu0
  %v1200 = vadd.f32 0.0, %v1199
  %v1201 = vpop.f32.mrb[0].mxu0
  %1202 = vmatprep.mubr.f32.mxu0 0.0
  %1203 = vmatmul.mubr.f32.gmra.mrb[0].mxu0 %v1102
  %v1204 = vpop.f32.mrb[0].mxu0
  %v1205 = vadd.f32 0.0, %v1204
  %v1206 = vpop.f32.mrb[0].mxu0
  %1207 = vmatprep.mubr.f32.mxu0 0.0
  %1208 = vmatmul.mubr.f32.gmra.mrb[0].mxu0 %v1105
  %v1209 = vpop.f32.mrb[0].mxu0
  %v1210 = vadd.f32 0.0, %v1209
  %v1211 = vpop.f32.mrb[0].mxu0
  %1212 = vmatprep.mubr.f32.mxu0 0.0
  %1213 = vmatmul.mubr.f32.gmra.mrb[0].mxu0 %v1108
  %v1214 = vpop.f32.mrb[0].mxu0
  %v1215 = vadd.f32 0.0, %v1214
  %v1216 = vpop.f32.mrb[0].mxu0
  %1217 = vdwg.mxu0
  %v1218 = vmul.f32 %v1062, %v1180
  %v1219 = vmul.f32 %v1064, %v1185
  %v1220 = vmul.f32 %v1066, %v1190
  %v1221 = vmul.f32 %v1068, %v1195
  %v1222 = vmul.f32 %v1070, %v1200
  %v1223 = vmul.f32 %v1072, %v1205
  %v1224 = vmul.f32 %v1074, %v1210
  %v1225 = vmul.f32 %v1076, %v1215
  %vm1226 = vcmask 64512
  %v1228 = vsel %vm1226, %v1062, 0
  %v1231 = vsel %vm1226, %v1064, 0
  %v1234 = vsel %vm1226, %v1066, 0
  %v1237 = vsel %vm1226, %v1068, 0
  %v1240 = vsel %vm1226, %v1070, 0
  %v1243 = vsel %vm1226, %v1072, 0
  %v1246 = vsel %vm1226, %v1074, 0
  %v1249 = vsel %vm1226, %v1076, 0
  %1251 = vmatprep.subr.mxu0 0.0
  %1252 = vmatpush1.msra.mxu0 %v1077
  %1253 = vmatprep.subr.mxu0 0.0
  %1254 = vmatpush1.msra.mxu0 0.0
  %1255 = vmatprep.subr.mxu0 0.0
  %1256 = vmatpush1.msra.mxu0 0.0
  %1257 = vmatprep.subr.mxu0 0.0
  %1258 = vmatpush1.msra.mxu0 0.0
  %1259 = vmatprep.subr.mxu0 0.0
  %1260 = vmatpush1.msra.mxu0 0.0
  %1261 = vmatprep.subr.mxu0 0.0
  %1262 = vmatpush1.msra.mxu0 0.0
  %1263 = vmatprep.subr.mxu0 0.0
  %1264 = vmatpush1.msra.mxu0 0.0
  %1265 = vmatprep.subr.mxu0 0.0
  %1266 = vmatpush1.msra.mxu0 0.0
  %1267 = vmatprep.subr.mxu0 0.0
  %1268 = vmatpush1.msra.mxu0 0.0
  %1269 = vmatprep.subr.mxu0 0.0
  %1270 = vmatpush1.msra.mxu0 0.0
  %1271 = vmatprep.subr.mxu0 0.0
  %1272 = vmatpush1.msra.mxu0 0.0
  %1273 = vmatprep.subr.mxu0 0.0
  %1274 = vmatpush1.msra.mxu0 0.0
  %1275 = vmatprep.subr.mxu0 0.0
  %1276 = vmatpush1.msra.mxu0 0.0
  %1277 = vmatprep.subr.mxu0 0.0
  %1278 = vmatpush1.msra.mxu0 0.0
  %1279 = vmatprep.subr.mxu0 0.0
  %1280 = vmatpush1.msra.mxu0 0.0
  %1281 = vmatprep.subr.mxu0 0.0
  %1282 = vmatpush1.msra.mxu0 0.0
  %1283 = vmatprep.subr.mxu0 0.0
  %1284 = vmatpush1.msra.mxu0 0.0
  %1285 = vmatprep.subr.mxu0 0.0
  %1286 = vmatpush1.msra.mxu0 0.0
  %1287 = vmatprep.subr.mxu0 0.0
  %1288 = vmatpush1.msra.mxu0 0.0
  %1289 = vmatprep.subr.mxu0 0.0
  %1290 = vmatpush1.msra.mxu0 0.0
  %1291 = vmatprep.subr.mxu0 0.0
  %1292 = vmatpush1.msra.mxu0 0.0
  %1293 = vmatprep.subr.mxu0 0.0
  %1294 = vmatpush1.msra.mxu0 0.0
  %1295 = vmatprep.subr.mxu0 0.0
  %1296 = vmatpush1.msra.mxu0 0.0
  %1297 = vmatprep.subr.mxu0 0.0
  %1298 = vmatpush1.msra.mxu0 0.0
  %1299 = vmatprep.subr.mxu0 0.0
  %1300 = vmatpush1.msra.mxu0 0.0
  %1301 = vmatprep.subr.mxu0 0.0
  %1302 = vmatpush1.msra.mxu0 0.0
  %1303 = vmatprep.subr.mxu0 0.0
  %1304 = vmatpush1.msra.mxu0 0.0
  %1305 = vmatprep.subr.mxu0 0.0
  %1306 = vmatpush1.msra.mxu0 0.0
  %1307 = vmatprep.subr.mxu0 0.0
  %1308 = vmatpush1.msra.mxu0 0.0
  %1309 = vmatprep.subr.mxu0 0.0
  %1310 = vmatpush1.msra.mxu0 0.0
  %1311 = vmatprep.subr.mxu0 0.0
  %1312 = vmatpush1.msra.mxu0 0.0
  %1313 = vmatprep.subr.mxu0 0.0
  %1314 = vmatpush1.msra.mxu0 0.0
  %1315 = vmatprep.mubr.f32.mxu0 0.0
  %1316 = vmatmul.mubr.f32.gmra.mrb[0].mxu0 %v1228
  %v1317 = vpop.f32.mrb[0].mxu0
  %v1318 = vadd.f32 0.0, %v1317
  %v1319 = vpop.f32.mrb[0].mxu0
  %1320 = vmatprep.mubr.f32.mxu0 0.0
  %1321 = vmatmul.mubr.f32.gmra.mrb[0].mxu0 %v1231
  %v1322 = vpop.f32.mrb[0].mxu0
  %v1323 = vadd.f32 0.0, %v1322
  %v1324 = vpop.f32.mrb[0].mxu0
  %1325 = vmatprep.mubr.f32.mxu0 0.0
  %1326 = vmatmul.mubr.f32.gmra.mrb[0].mxu0 %v1234
  %v1327 = vpop.f32.mrb[0].mxu0
  %v1328 = vadd.f32 0.0, %v1327
  %v1329 = vpop.f32.mrb[0].mxu0
  %1330 = vmatprep.mubr.f32.mxu0 0.0
  %1331 = vmatmul.mubr.f32.gmra.mrb[0].mxu0 %v1237
  %v1332 = vpop.f32.mrb[0].mxu0
  %v1333 = vadd.f32 0.0, %v1332
  %v1334 = vpop.f32.mrb[0].mxu0
  %1335 = vmatprep.mubr.f32.mxu0 0.0
  %1336 = vmatmul.mubr.f32.gmra.mrb[0].mxu0 %v1240
  %v1337 = vpop.f32.mrb[0].mxu0
  %v1338 = vadd.f32 0.0, %v1337
  %v1339 = vpop.f32.mrb[0].mxu0
  %1340 = vmatprep.mubr.f32.mxu0 0.0
  %1341 = vmatmul.mubr.f32.gmra.mrb[0].mxu0 %v1243
  %v1342 = vpop.f32.mrb[0].mxu0
  %v1343 = vadd.f32 0.0, %v1342
  %v1344 = vpop.f32.mrb[0].mxu0
  %1345 = vmatprep.mubr.f32.mxu0 0.0
  %1346 = vmatmul.mubr.f32.gmra.mrb[0].mxu0 %v1246
  %v1347 = vpop.f32.mrb[0].mxu0
  %v1348 = vadd.f32 0.0, %v1347
  %v1349 = vpop.f32.mrb[0].mxu0
  %1350 = vmatprep.mubr.f32.mxu0 0.0
  %1351 = vmatmul.mubr.f32.gmra.mrb[0].mxu0 %v1249
  %v1352 = vpop.f32.mrb[0].mxu0
  %v1353 = vadd.f32 0.0, %v1352
  %v1354 = vpop.f32.mrb[0].mxu0
  %1355 = vdwg.mxu0
  %v1356 = vmul.f32 %v668, %v1318
  %v1357 = vmul.f32 %v669, %v1323
  %v1358 = vmul.f32 %v670, %v1328
  %v1359 = vmul.f32 %v671, %v1333
  %v1360 = vmul.f32 %v672, %v1338
  %v1361 = vmul.f32 %v673, %v1343
  %v1362 = vmul.f32 %v674, %v1348
  %v1363 = vmul.f32 %v675, %v1353
  %v1364 = vld [vmem:[%s8] sm:$0xff]
  %v1365 = vld [vmem:[%s8 + $0x8] sm:$0xff]
  %v1366 = vld [vmem:[%s8 + $0x10] sm:$0xff]
  %v1367 = vld [vmem:[%s8 + $0x18] sm:$0xff]
  %v1368 = vld [vmem:[%s9] sm:$0x1]
  %v1370 = vlaneseq
  %v1371 = vshrl.u32 %v1370, 7
  %v1372 = vsub.s32 0, %v1371
  %v1373 = vrot.slane %v1368, %v1372
  %v1376 = vsel %vm294, %v1356, 0
  %v1379 = vsel %vm294, %v1357, 0
  %v1382 = vsel %vm294, %v1358, 0
  %v1385 = vsel %vm294, %v1359, 0
  %v1388 = vsel %vm294, %v1360, 0
  %v1391 = vsel %vm294, %v1361, 0
  %v1394 = vsel %vm294, %v1362, 0
  %v1397 = vsel %vm294, %v1363, 0
  %1399 = vmatprep.subr.mxu0 0.0
  %1400 = vmatpush1.msra.mxu0 %v1364
  %1401 = vmatprep.subr.mxu0 0.0
  %1402 = vmatpush1.msra.mxu0 %v1365
  %1403 = vmatprep.subr.mxu0 0.0
  %1404 = vmatpush1.msra.mxu0 %v1366
  %1405 = vmatprep.subr.mxu0 0.0
  %1406 = vmatpush1.msra.mxu0 %v1367
  %1407 = vmatprep.subr.mxu0 0.0
  %1408 = vmatpush1.msra.mxu0 0.0
  %1409 = vmatprep.subr.mxu0 0.0
  %1410 = vmatpush1.msra.mxu0 0.0
  %1411 = vmatprep.subr.mxu0 0.0
  %1412 = vmatpush1.msra.mxu0 0.0
  %1413 = vmatprep.subr.mxu0 0.0
  %1414 = vmatpush1.msra.mxu0 0.0
  %1415 = vmatprep.subr.mxu0 0.0
  %1416 = vmatpush1.msra.mxu0 0.0
  %1417 = vmatprep.subr.mxu0 0.0
  %1418 = vmatpush1.msra.mxu0 0.0
  %1419 = vmatprep.subr.mxu0 0.0
  %1420 = vmatpush1.msra.mxu0 0.0
  %1421 = vmatprep.subr.mxu0 0.0
  %1422 = vmatpush1.msra.mxu0 0.0
  %1423 = vmatprep.subr.mxu0 0.0
  %1424 = vmatpush1.msra.mxu0 0.0
  %1425 = vmatprep.subr.mxu0 0.0
  %1426 = vmatpush1.msra.mxu0 0.0
  %1427 = vmatprep.subr.mxu0 0.0
  %1428 = vmatpush1.msra.mxu0 0.0
  %1429 = vmatprep.subr.mxu0 0.0
  %1430 = vmatpush1.msra.mxu0 0.0
  %1431 = vmatprep.subr.mxu0 0.0
  %1432 = vmatpush1.msra.mxu0 0.0
  %1433 = vmatprep.subr.mxu0 0.0
  %1434 = vmatpush1.msra.mxu0 0.0
  %1435 = vmatprep.subr.mxu0 0.0
  %1436 = vmatpush1.msra.mxu0 0.0
  %1437 = vmatprep.subr.mxu0 0.0
  %1438 = vmatpush1.msra.mxu0 0.0
  %1439 = vmatprep.subr.mxu0 0.0
  %1440 = vmatpush1.msra.mxu0 0.0
  %1441 = vmatprep.subr.mxu0 0.0
  %1442 = vmatpush1.msra.mxu0 0.0
  %1443 = vmatprep.subr.mxu0 0.0
  %1444 = vmatpush1.msra.mxu0 0.0
  %1445 = vmatprep.subr.mxu0 0.0
  %1446 = vmatpush1.msra.mxu0 0.0
  %1447 = vmatprep.subr.mxu0 0.0
  %1448 = vmatpush1.msra.mxu0 0.0
  %1449 = vmatprep.subr.mxu0 0.0
  %1450 = vmatpush1.msra.mxu0 0.0
  %1451 = vmatprep.subr.mxu0 0.0
  %1452 = vmatpush1.msra.mxu0 0.0
  %1453 = vmatprep.subr.mxu0 0.0
  %1454 = vmatpush1.msra.mxu0 0.0
  %1455 = vmatprep.subr.mxu0 0.0
  %1456 = vmatpush1.msra.mxu0 0.0
  %1457 = vmatprep.subr.mxu0 0.0
  %1458 = vmatpush1.msra.mxu0 0.0
  %1459 = vmatprep.subr.mxu0 0.0
  %1460 = vmatpush1.msra.mxu0 0.0
  %1461 = vmatprep.subr.mxu0 0.0
  %1462 = vmatpush1.msra.mxu0 0.0
  %1463 = vmatprep.mubr.f32.mxu0 0.0
  %1464 = vmatmul.mubr.f32.gmra.mrb[0].mxu0 %v1376
  %v1465 = vpop.f32.mrb[0].mxu0
  %v1466 = vadd.f32 %v1373, %v1465
  %v1467 = vpop.f32.mrb[0].mxu0
  %1468 = vmatprep.mubr.f32.mxu0 0.0
  %1469 = vmatmul.mubr.f32.gmra.mrb[0].mxu0 %v1379
  %v1470 = vpop.f32.mrb[0].mxu0
  %v1471 = vadd.f32 %v1373, %v1470
  %v1472 = vpop.f32.mrb[0].mxu0
  %1473 = vmatprep.mubr.f32.mxu0 0.0
  %1474 = vmatmul.mubr.f32.gmra.mrb[0].mxu0 %v1382
  %v1475 = vpop.f32.mrb[0].mxu0
  %v1476 = vadd.f32 %v1373, %v1475
  %v1477 = vpop.f32.mrb[0].mxu0
  %1478 = vmatprep.mubr.f32.mxu0 0.0
  %1479 = vmatmul.mubr.f32.gmra.mrb[0].mxu0 %v1385
  %v1480 = vpop.f32.mrb[0].mxu0
  %v1481 = vadd.f32 %v1373, %v1480
  %v1482 = vpop.f32.mrb[0].mxu0
  %1483 = vmatprep.mubr.f32.mxu0 0.0
  %1484 = vmatmul.mubr.f32.gmra.mrb[0].mxu0 %v1388
  %v1485 = vpop.f32.mrb[0].mxu0
  %v1486 = vadd.f32 %v1373, %v1485
  %v1487 = vpop.f32.mrb[0].mxu0
  %1488 = vmatprep.mubr.f32.mxu0 0.0
  %1489 = vmatmul.mubr.f32.gmra.mrb[0].mxu0 %v1391
  %v1490 = vpop.f32.mrb[0].mxu0
  %v1491 = vadd.f32 %v1373, %v1490
  %v1492 = vpop.f32.mrb[0].mxu0
  %1493 = vmatprep.mubr.f32.mxu0 0.0
  %1494 = vmatmul.mubr.f32.gmra.mrb[0].mxu0 %v1394
  %v1495 = vpop.f32.mrb[0].mxu0
  %v1496 = vadd.f32 %v1373, %v1495
  %v1497 = vpop.f32.mrb[0].mxu0
  %1498 = vmatprep.mubr.f32.mxu0 0.0
  %1499 = vmatmul.mubr.f32.gmra.mrb[0].mxu0 %v1397
  %v1500 = vpop.f32.mrb[0].mxu0
  %v1501 = vadd.f32 %v1373, %v1500
  %v1502 = vpop.f32.mrb[0].mxu0
  %1503 = vdwg.mxu0
  %1512 = vrot.lane.b32.xlu0 %v1466, 8
  %v1513 = vpop.permute.xlu0 %1512
  %1514 = vrot.lane.b32.xlu0 %v1471, 8
  %v1515 = vpop.permute.xlu0 %1514
  %1516 = vrot.lane.b32.xlu0 %v1476, 8
  %v1517 = vpop.permute.xlu0 %1516
  %1518 = vrot.lane.b32.xlu0 %v1481, 8
  %v1519 = vpop.permute.xlu0 %1518
  %1520 = vrot.lane.b32.xlu0 %v1486, 8
  %v1521 = vpop.permute.xlu0 %1520
  %1522 = vrot.lane.b32.xlu0 %v1491, 8
  %v1523 = vpop.permute.xlu0 %1522
  %1524 = vrot.lane.b32.xlu0 %v1496, 8
  %v1525 = vpop.permute.xlu0 %1524
  %1526 = vrot.lane.b32.xlu0 %v1501, 8
  %v1527 = vpop.permute.xlu0 %1526
  %1544 = vrot.lane.b32.xlu0 %v164, 104
  %v1545 = vpop.permute.xlu0 %1544
  %1546 = vrot.lane.b32.xlu0 %v170, 104
  %v1547 = vpop.permute.xlu0 %1546
  %1548 = vrot.lane.b32.xlu0 %v176, 104
  %v1549 = vpop.permute.xlu0 %1548
  %1550 = vrot.lane.b32.xlu0 %v182, 104
  %v1551 = vpop.permute.xlu0 %1550
  %1552 = vrot.lane.b32.xlu0 %v188, 104
  %v1553 = vpop.permute.xlu0 %1552
  %1554 = vrot.lane.b32.xlu0 %v194, 104
  %v1555 = vpop.permute.xlu0 %1554
  %1556 = vrot.lane.b32.xlu0 %v200, 104
  %v1557 = vpop.permute.xlu0 %1556
  %1558 = vrot.lane.b32.xlu0 %v206, 104
  %v1559 = vpop.permute.xlu0 %1558
  %v1568 = vsel %vm1226, %v1218, %v1513
  %v1569 = vsel %vm1226, %v1219, %v1515
  %v1570 = vsel %vm1226, %v1220, %v1517
  %v1571 = vsel %vm1226, %v1221, %v1519
  %v1572 = vsel %vm1226, %v1222, %v1521
  %v1573 = vsel %vm1226, %v1223, %v1523
  %v1574 = vsel %vm1226, %v1224, %v1525
  %v1575 = vsel %vm1226, %v1225, %v1527
  %vm1576 = vcmask 326656
  %v1577 = vsel %vm1576, %v1568, %v1545
  %v1578 = vsel %vm1576, %v1569, %v1547
  %v1579 = vsel %vm1576, %v1570, %v1549
  %v1580 = vsel %vm1576, %v1571, %v1551
  %v1581 = vsel %vm1576, %v1572, %v1553
  %v1582 = vsel %vm1576, %v1573, %v1555
  %v1583 = vsel %vm1576, %v1574, %v1557
  %v1584 = vsel %vm1576, %v1575, %v1559
  %vm1585 = vcmask 588800
  %v1586 = vsel %vm1585, %v1577, 0.0
  %v1587 = vsel %vm1585, %v1578, 0.0
  %v1588 = vsel %vm1585, %v1579, 0.0
  %v1589 = vsel %vm1585, %v1580, 0.0
  %v1590 = vsel %vm1585, %v1581, 0.0
  %v1591 = vsel %vm1585, %v1582, 0.0
  %v1592 = vsel %vm1585, %v1583, 0.0
  %v1593 = vsel %vm1585, %v1584, 0.0
  %1594 = vst [vmem:[%s11] sm:$0xff] %v1586
  %1595 = vst [vmem:[%s11 + $0x8] sm:$0xff] %v1587
  %1596 = vst [vmem:[%s11 + $0x10] sm:$0xff] %v1588
  %1597 = vst [vmem:[%s11 + $0x18] sm:$0xff] %v1589
  %1598 = vst [vmem:[%s11 + $0x20] sm:$0xff] %v1590
  %1599 = vst [vmem:[%s11 + $0x28] sm:$0xff] %v1591
  %1600 = vst [vmem:[%s11 + $0x30] sm:$0xff] %v1592
  %1601 = vst [vmem:[%s11 + $0x38] sm:$0xff] %v1593
  // Predicated region
  $region46: #{egnn_forward.3} parent=0 // pred_check
    _
  $region47: #{egnn_forward.3} parent=0 // pred_check_branch
    %1603 = sbr.rel (0) target = $region49
  $region48: #{egnn_forward.3} parent=0 // pred_region
    _
  $region49: #{egnn_forward.3} parent=0 // pred_fallthru
    _
  // Predicated region
  $region50: #{egnn_forward.3} parent=0 // pred_check
    _
  $region51: #{egnn_forward.3} parent=0 // pred_check_branch
    %1605 = sbr.rel (0) target = $region53
  $region52: #{egnn_forward.3} parent=0 // pred_region
    _
  $region53: #{egnn_forward.3} parent=0 // pred_fallthru
    _

// kernel: egnn_forward.5
$region0: #{egnn_forward.5}
  #allocation0 [shape = 'u32[]', space=smem, size = 0x4, offset = 0x4, fixed_abs, tag = 'smem constant byte address 0x4 - core index']
  #allocation1 [shape = 'u32[144,128]{1,0:T(1,128)}', space=vmem, size = 0x12000, scoped, tag = 'internal scratch']
  %s0 = inlined_call_operand.vmem [shape: f32[16,32], index: 0, kind: input, shape index: {}]
  %s1 = inlined_call_operand.vmem [shape: f32[16,32], index: 1, kind: input, shape index: {}]
  %s2 = inlined_call_operand.vmem [shape: f32[32,32], index: 2, kind: input, shape index: {}]
  %s3 = inlined_call_operand.vmem [shape: f32[1,32], index: 3, kind: input, shape index: {}]
  %s4 = inlined_call_operand.vmem [shape: f32[32,32], index: 4, kind: input, shape index: {}]
  %s5 = inlined_call_operand.vmem [shape: f32[1,32], index: 5, kind: input, shape index: {}]
  %s6 = inlined_call_operand.vmem [shape: f32[16,128], index: 6, kind: output, shape index: {}]
  %s7 = sld [smem:[#allocation0]]
  $region34: #{egnn_forward.5} parent=0
    _
  %s9 = ssub.s32 1, %s7
  %s10 = scalar_select 0, %s9, %s7
  // Predicated region
  $region2: #{egnn_forward.5} parent=0 // pred_check
    _
  $region3: #{egnn_forward.5} parent=0 // pred_check_branch
    %12 = sbr.rel (0) target = $region5
  $region4: #{egnn_forward.5} parent=0 // pred_region
    _
  $region5: #{egnn_forward.5} parent=0 // pred_fallthru
    _
  // Predicated region
  $region6: #{egnn_forward.5} parent=0 // pred_check
    _
  $region7: #{egnn_forward.5} parent=0 // pred_check_branch
    %14 = sbr.rel (0) target = $region9
  $region8: #{egnn_forward.5} parent=0 // pred_region
    _
  $region9: #{egnn_forward.5} parent=0 // pred_fallthru
    _
  // Predicated region
  $region10: #{egnn_forward.5} parent=0 // pred_check
    _
  $region11: #{egnn_forward.5} parent=0 // pred_check_branch
    %16 = sbr.rel (0) target = $region13
  $region12: #{egnn_forward.5} parent=0 // pred_region
    _
  $region13: #{egnn_forward.5} parent=0 // pred_fallthru
    _
  // Predicated region
  $region14: #{egnn_forward.5} parent=0 // pred_check
    _
  $region15: #{egnn_forward.5} parent=0 // pred_check_branch
    %18 = sbr.rel (0) target = $region17
  $region16: #{egnn_forward.5} parent=0 // pred_region
    _
  $region17: #{egnn_forward.5} parent=0 // pred_fallthru
    _
  // Predicated region
  $region18: #{egnn_forward.5} parent=0 // pred_check
    _
  $region19: #{egnn_forward.5} parent=0 // pred_check_branch
    %20 = sbr.rel (0) target = $region21
  $region20: #{egnn_forward.5} parent=0 // pred_region
    _
  $region21: #{egnn_forward.5} parent=0 // pred_fallthru
    _
  // Predicated region
  $region22: #{egnn_forward.5} parent=0 // pred_check
    _
  $region23: #{egnn_forward.5} parent=0 // pred_check_branch
    %22 = sbr.rel (0) target = $region25
  $region24: #{egnn_forward.5} parent=0 // pred_region
    _
  $region25: #{egnn_forward.5} parent=0 // pred_fallthru
    _
  %v23 = vld [vmem:[%s0] sm:$0xff]
  %v24 = vld [vmem:[%s0 + $0x8] sm:$0xff]
  %v25 = vld [vmem:[%s1] sm:$0xff]
  %v26 = vld [vmem:[%s1 + $0x8] sm:$0xff]
  %v27 = vld [vmem:[%s2] sm:$0xff]
  %v28 = vld [vmem:[%s2 + $0x8] sm:$0xff]
  %v29 = vld [vmem:[%s2 + $0x10] sm:$0xff]
  %v30 = vld [vmem:[%s2 + $0x18] sm:$0xff]
  %v31 = vld [vmem:[%s3] sm:$0x1]
  %v33 = vlaneseq
  %v34 = vshrl.u32 %v33, 7
  %v35 = vsub.s32 0, %v34
  %v36 = vrot.slane %v31, %v35
  %vm38 = vcmask 261120
  %v40 = vsel %vm38, %v23, 0
  %v43 = vsel %vm38, %v24, 0
  %45 = vmatprep.subr.mxu0 0.0
  %46 = vmatpush1.msra.mxu0 %v27
  %47 = vmatprep.subr.mxu0 0.0
  %48 = vmatpush1.msra.mxu0 %v28
  %49 = vmatprep.subr.mxu0 0.0
  %50 = vmatpush1.msra.mxu0 %v29
  %51 = vmatprep.subr.mxu0 0.0
  %52 = vmatpush1.msra.mxu0 %v30
  %53 = vmatprep.subr.mxu0 0.0
  %54 = vmatpush1.msra.mxu0 0.0
  %55 = vmatprep.subr.mxu0 0.0
  %56 = vmatpush1.msra.mxu0 0.0
  %57 = vmatprep.subr.mxu0 0.0
  %58 = vmatpush1.msra.mxu0 0.0
  %59 = vmatprep.subr.mxu0 0.0
  %60 = vmatpush1.msra.mxu0 0.0
  %61 = vmatprep.subr.mxu0 0.0
  %62 = vmatpush1.msra.mxu0 0.0
  %63 = vmatprep.subr.mxu0 0.0
  %64 = vmatpush1.msra.mxu0 0.0
  %65 = vmatprep.subr.mxu0 0.0
  %66 = vmatpush1.msra.mxu0 0.0
  %67 = vmatprep.subr.mxu0 0.0
  %68 = vmatpush1.msra.mxu0 0.0
  %69 = vmatprep.subr.mxu0 0.0
  %70 = vmatpush1.msra.mxu0 0.0
  %71 = vmatprep.subr.mxu0 0.0
  %72 = vmatpush1.msra.mxu0 0.0
  %73 = vmatprep.subr.mxu0 0.0
  %74 = vmatpush1.msra.mxu0 0.0
  %75 = vmatprep.subr.mxu0 0.0
  %76 = vmatpush1.msra.mxu0 0.0
  %77 = vmatprep.subr.mxu0 0.0
  %78 = vmatpush1.msra.mxu0 0.0
  %79 = vmatprep.subr.mxu0 0.0
  %80 = vmatpush1.msra.mxu0 0.0
  %81 = vmatprep.subr.mxu0 0.0
  %82 = vmatpush1.msra.mxu0 0.0
  %83 = vmatprep.subr.mxu0 0.0
  %84 = vmatpush1.msra.mxu0 0.0
  %85 = vmatprep.subr.mxu0 0.0
  %86 = vmatpush1.msra.mxu0 0.0
  %87 = vmatprep.subr.mxu0 0.0
  %88 = vmatpush1.msra.mxu0 0.0
  %89 = vmatprep.subr.mxu0 0.0
  %90 = vmatpush1.msra.mxu0 0.0
  %91 = vmatprep.subr.mxu0 0.0
  %92 = vmatpush1.msra.mxu0 0.0
  %93 = vmatprep.subr.mxu0 0.0
  %94 = vmatpush1.msra.mxu0 0.0
  %95 = vmatprep.subr.mxu0 0.0
  %96 = vmatpush1.msra.mxu0 0.0
  %97 = vmatprep.subr.mxu0 0.0
  %98 = vmatpush1.msra.mxu0 0.0
  %99 = vmatprep.subr.mxu0 0.0
  %100 = vmatpush1.msra.mxu0 0.0
  %101 = vmatprep.subr.mxu0 0.0
  %102 = vmatpush1.msra.mxu0 0.0
  %103 = vmatprep.subr.mxu0 0.0
  %104 = vmatpush1.msra.mxu0 0.0
  %105 = vmatprep.subr.mxu0 0.0
  %106 = vmatpush1.msra.mxu0 0.0
  %107 = vmatprep.subr.mxu0 0.0
  %108 = vmatpush1.msra.mxu0 0.0
  %109 = vmatprep.mubr.f32.mxu0 0.0
  %110 = vmatmul.mubr.f32.gmra.mrb[0].mxu0 %v40
  %v111 = vpop.f32.mrb[0].mxu0
  %v112 = vadd.f32 %v36, %v111
  %v113 = vpop.f32.mrb[0].mxu0
  %114 = vmatprep.mubr.f32.mxu0 0.0
  %115 = vmatmul.mubr.f32.gmra.mrb[0].mxu0 %v43
  %v116 = vpop.f32.mrb[0].mxu0
  %v117 = vadd.f32 %v36, %v116
  %v118 = vpop.f32.mrb[0].mxu0
  %119 = vdwg.mxu0
  %vm120 = vcmp.ge.f32.partialorder %v112, 0.0
  %vm121 = vcmp.ge.f32.partialorder %v117, 0.0
  %v122 = vmul.f32 %v112, 0.01
  %v123 = vmul.f32 %v117, 0.01
  %v124 = vsel %vm120, %v112, %v122
  %v125 = vsel %vm121, %v117, %v123
  %v126 = vld [vmem:[%s4] sm:$0xff]
  %v127 = vld [vmem:[%s4 + $0x8] sm:$0xff]
  %v128 = vld [vmem:[%s4 + $0x10] sm:$0xff]
  %v129 = vld [vmem:[%s4 + $0x18] sm:$0xff]
  %v130 = vld [vmem:[%s5] sm:$0x1]
  %v132 = vlaneseq
  %v133 = vshrl.u32 %v132, 7
  %v134 = vsub.s32 0, %v133
  %v135 = vrot.slane %v130, %v134
  %v138 = vsel %vm38, %v124, 0
  %v141 = vsel %vm38, %v125, 0
  %143 = vmatprep.subr.mxu0 0.0
  %144 = vmatpush1.msra.mxu0 %v126
  %145 = vmatprep.subr.mxu0 0.0
  %146 = vmatpush1.msra.mxu0 %v127
  %147 = vmatprep.subr.mxu0 0.0
  %148 = vmatpush1.msra.mxu0 %v128
  %149 = vmatprep.subr.mxu0 0.0
  %150 = vmatpush1.msra.mxu0 %v129
  %151 = vmatprep.subr.mxu0 0.0
  %152 = vmatpush1.msra.mxu0 0.0
  %153 = vmatprep.subr.mxu0 0.0
  %154 = vmatpush1.msra.mxu0 0.0
  %155 = vmatprep.subr.mxu0 0.0
  %156 = vmatpush1.msra.mxu0 0.0
  %157 = vmatprep.subr.mxu0 0.0
  %158 = vmatpush1.msra.mxu0 0.0
  %159 = vmatprep.subr.mxu0 0.0
  %160 = vmatpush1.msra.mxu0 0.0
  %161 = vmatprep.subr.mxu0 0.0
  %162 = vmatpush1.msra.mxu0 0.0
  %163 = vmatprep.subr.mxu0 0.0
  %164 = vmatpush1.msra.mxu0 0.0
  %165 = vmatprep.subr.mxu0 0.0
  %166 = vmatpush1.msra.mxu0 0.0
  %167 = vmatprep.subr.mxu0 0.0
  %168 = vmatpush1.msra.mxu0 0.0
  %169 = vmatprep.subr.mxu0 0.0
  %170 = vmatpush1.msra.mxu0 0.0
  %171 = vmatprep.subr.mxu0 0.0
  %172 = vmatpush1.msra.mxu0 0.0
  %173 = vmatprep.subr.mxu0 0.0
  %174 = vmatpush1.msra.mxu0 0.0
  %175 = vmatprep.subr.mxu0 0.0
  %176 = vmatpush1.msra.mxu0 0.0
  %177 = vmatprep.subr.mxu0 0.0
  %178 = vmatpush1.msra.mxu0 0.0
  %179 = vmatprep.subr.mxu0 0.0
  %180 = vmatpush1.msra.mxu0 0.0
  %181 = vmatprep.subr.mxu0 0.0
  %182 = vmatpush1.msra.mxu0 0.0
  %183 = vmatprep.subr.mxu0 0.0
  %184 = vmatpush1.msra.mxu0 0.0
  %185 = vmatprep.subr.mxu0 0.0
  %186 = vmatpush1.msra.mxu0 0.0
  %187 = vmatprep.subr.mxu0 0.0
  %188 = vmatpush1.msra.mxu0 0.0
  %189 = vmatprep.subr.mxu0 0.0
  %190 = vmatpush1.msra.mxu0 0.0
  %191 = vmatprep.subr.mxu0 0.0
  %192 = vmatpush1.msra.mxu0 0.0
  %193 = vmatprep.subr.mxu0 0.0
  %194 = vmatpush1.msra.mxu0 0.0
  %195 = vmatprep.subr.mxu0 0.0
  %196 = vmatpush1.msra.mxu0 0.0
  %197 = vmatprep.subr.mxu0 0.0
  %198 = vmatpush1.msra.mxu0 0.0
  %199 = vmatprep.subr.mxu0 0.0
  %200 = vmatpush1.msra.mxu0 0.0
  %201 = vmatprep.subr.mxu0 0.0
  %202 = vmatpush1.msra.mxu0 0.0
  %203 = vmatprep.subr.mxu0 0.0
  %204 = vmatpush1.msra.mxu0 0.0
  %205 = vmatprep.subr.mxu0 0.0
  %206 = vmatpush1.msra.mxu0 0.0
  %207 = vmatprep.mubr.f32.mxu0 0.0
  %208 = vmatmul.mubr.f32.gmra.mrb[0].mxu0 %v138
  %v209 = vpop.f32.mrb[0].mxu0
  %v210 = vadd.f32 %v135, %v209
  %v211 = vpop.f32.mrb[0].mxu0
  %212 = vmatprep.mubr.f32.mxu0 0.0
  %213 = vmatmul.mubr.f32.gmra.mrb[0].mxu0 %v141
  %v214 = vpop.f32.mrb[0].mxu0
  %v215 = vadd.f32 %v135, %v214
  %v216 = vpop.f32.mrb[0].mxu0
  %217 = vdwg.mxu0
  %v218 = vmul.f32 %v25, %v210
  %v219 = vmul.f32 %v26, %v215
  %v220 = vadd.f32 %v218, %v23
  %v221 = vadd.f32 %v219, %v24
  %v222 = vsel %vm38, %v220, 0.0
  %v223 = vsel %vm38, %v221, 0.0
  %224 = vst [vmem:[%s6] sm:$0xff] %v222
  %225 = vst [vmem:[%s6 + $0x8] sm:$0xff] %v223
  // Predicated region
  $region26: #{egnn_forward.5} parent=0 // pred_check
    _
  $region27: #{egnn_forward.5} parent=0 // pred_check_branch
    %227 = sbr.rel (0) target = $region29
  $region28: #{egnn_forward.5} parent=0 // pred_region
    _
  $region29: #{egnn_forward.5} parent=0 // pred_fallthru
    _
  // Predicated region
  $region30: #{egnn_forward.5} parent=0 // pred_check
    _
  $region31: #{egnn_forward.5} parent=0 // pred_check_branch
    %229 = sbr.rel (0) target = $region33
  $region32: #{egnn_forward.5} parent=0 // pred_region
    _
  $region33: #{egnn_forward.5} parent=0 // pred_fallthru
    _

</llo_original>
